<compile_context>
chip_gen: v6e
topology: v6e:2x2x1
jax: 0.10.0
libtpu: 0.0.40
codegen_flags: <defaults>
</compile_context>

<pallas_src>
import functools

import jax
import jax.numpy as jnp
from jax import lax
from jax.experimental import pallas as pl
from jax.experimental.pallas import tpu as pltpu

KSIZE = 11
PAD = KSIZE // 2            # 5
NEG_SLOPE = 0.1

# Fused-stack halos, rounded up to multiples of 8 so every intermediate row
# count (matmul M dim) and window offset is sublane-aligned:
#   h2 (layer-3 input) halo : >= PAD          -> 8
#   h1 (layer-2 input) halo : >= 8  + PAD     -> 16
#   x  (layer-1 input) halo : >= 16 + PAD     -> 24
# Each halo step is 8 and PAD = 5, so every layer reads its input window at the
# same static sub-offset OFF = 8 - PAD = 3.
HALO_H2 = 8
HALO_H1 = 16
HALO_X = 24
OFF = HALO_H2 - PAD          # 3
assert OFF == HALO_H1 - HALO_H2 - PAD == HALO_X - HALO_H1 - PAD


def _zero_outside(h, start_pos, seq_len):
    """Zero rows whose absolute sequence position falls outside [0, seq_len).

    Emulates each layer's own zero 'same'-padding when working on a halo'd
    tile (LeakyReLU(0) == 0, so masking post-activation is equivalent).
    """
    idx = lax.broadcasted_iota(jnp.int32, (h.shape[0], 1), 0) + start_pos
    return jnp.where((idx >= 0) & (idx < seq_len), h, 0.0)


def _conv_im2col(prev_bf, w_ref, b_ref, out_len, *, ksize, neg_slope,
                 k_chunk_lanes=256):
    """One conv layer as im2col matmul(s) + bias + LeakyReLU.

    prev_bf : bf16 input window; rows [OFF, OFF + out_len + ksize - 1) are used.
    w_ref   : (ksize*Cin, Cout) bf16, flat index k*Cin + ci.
    b_ref   : (1, Cout) f32.
    Returns (out_len, Cout) f32.

    The contraction is split into <=256-lane tap groups so the two K-tiles of
    the K=352 layer are independent dots the scheduler can put on both MXUs.
    """
    cin = prev_bf.shape[1]
    taps_per_chunk = max(1, k_chunk_lanes // cin)
    acc = None
    k = 0
    while k < ksize:
        kk = min(taps_per_chunk, ksize - k)
        slab = jnp.concatenate(
            [prev_bf[OFF + k + t: OFF + k + t + out_len, :] for t in range(kk)],
            axis=-1)                                   # (out_len, kk*cin) bf16
        w_part = w_ref[pl.ds(k * cin, kk * cin), :]    # aligned: k*cin % 256 == 0
        part = jnp.dot(slab, w_part, preferred_element_type=jnp.float32)
        acc = part if acc is None else acc + part
        k += kk
    acc = acc + b_ref[...].astype(jnp.float32)
    return jnp.where(acc >= 0.0, acc, neg_slope * acc)


def _fused_conv3_kernel(x_ref, w1_ref, b1_ref, w2_ref, b2_ref, w3p_ref, b3_ref,
                        o_ref, xpad_ref, *, seq_len, padded_len, tile_len,
                        cout, ksize, neg_slope):
    # x_ref    : (1, Lp, Cin) f32 full (padded) batch row, revisited over j
    # w1/w2    : (K*Cin, H) / (K*H, H) bf16 im2col layout
    # w3p      : (H, K*Cout) bf16, taps folded into N: w3p[ci, k*Cout+co]=w3[k,ci,co]
    # b*       : (1, C) f32
    # o_ref    : (1, TL, Cout)
    # xpad_ref : (Lp + 2*HALO_X, Cin) f32 persistent per-core scratch
    cin = xpad_ref.shape[1]
    j = pl.program_id(1)     # L-tile index; innermost (grid is row-major).

    # Fill the zero-padded row once per batch element.  Only the two 24-row
    # halo stripes are zeroed (O(halo), not O(L)).  The scratch is per
    # TensorCore, so this stays valid when the batch axis is sharded.
    @pl.when(j == 0)
    def _():
        zeros = jnp.zeros((HALO_X, cin), xpad_ref.dtype)
        xpad_ref[pl.ds(0, HALO_X), :] = zeros
        xpad_ref[pl.ds(HALO_X + padded_len, HALO_X), :] = zeros
        xpad_ref[pl.ds(HALO_X, padded_len), :] = x_ref[0]

    start = pl.multiple_of(j * tile_len, 8)            # tile_len % 8 == 0

    # Halo'd input window for this tile: positions [start-24, start+TL+24).
    xw = xpad_ref[pl.ds(start, tile_len + 2 * HALO_X), :]        # (TL+48, Cin)
    xw_bf = xw.astype(jnp.bfloat16)

    # Layer 1: rows r -> sequence positions start - 16 + r.
    h1 = _conv_im2col(xw_bf, w1_ref, b1_ref, tile_len + 2 * HALO_H1,
                      ksize=ksize, neg_slope=neg_slope)
    h1 = _zero_outside(h1, start - HALO_H1, seq_len)

    # Layer 2: rows r -> positions start - 8 + r.
    h2 = _conv_im2col(h1.astype(jnp.bfloat16), w2_ref, b2_ref,
                      tile_len + 2 * HALO_H2, ksize=ksize, neg_slope=neg_slope)
    h2 = _zero_outside(h2, start - HALO_H2, seq_len)

    # Layer 3, taps folded into N: single K=H, N=K*Cout matmul
    #   z[r, k*Cout + co] = sum_ci h2[r, ci] * w3[k, ci, co]
    # then 11 static shifted adds: out[t, co] = sum_k z[t + k + OFF, k*Cout + co].
    z = jnp.dot(h2.astype(jnp.bfloat16), w3p_ref[...],
                preferred_element_type=jnp.float32)    # (TL+16, K*Cout) f32
    acc = z[OFF: OFF + tile_len, 0:cout]
    for k in range(1, ksize):
        acc = acc + z[OFF + k: OFF + k + tile_len, k * cout:(k + 1) * cout]
    acc = acc + b3_ref[...].astype(jnp.float32)
    h3 = jnp.where(acc >= 0.0, acc, neg_slope * acc)

    o_ref[0] = h3.astype(o_ref.dtype)


def _pick_l_tile(L, cap=2048):
    """Sublane-aligned L tile; large to amortize ~0.35us per-grid-step cost."""
    if L <= cap:
        return max(8, -(-L // 8) * 8)
    return cap


def _vmem_limit_bytes():
    """96 MiB on 128-MiB-VMEM chips (v5e/v6e), ~48 MiB on v7x (64 MiB)."""
    try:
        cap = int(pltpu.get_tpu_info().vmem_capacity_bytes)
    except Exception:
        cap = 128 * 1024 * 1024
    return max(32 * 1024 * 1024, min(cap - 16 * 1024 * 1024, 96 * 1024 * 1024))


def fully_conv_forward(x, params, l_tile=None):
    """x: (B, L, input_dim) f32 -> (B, L, output_dim); matches FullyConv.forward."""
    (w1, b1), (w2, b2), (w3, b3) = params
    B, L, Cin = x.shape
    K = KSIZE
    H = w2.shape[2]
    Cout = w3.shape[2]

    TL = _pick_l_tile(L) if l_tile is None else max(8, -(-int(l_tile) // 8) * 8)
    assert TL % 8 == 0
    nL = -(-L // TL)
    Lp = nL * TL
    x_in = x if Lp == L else jnp.pad(x, ((0, 0), (0, Lp - L), (0, 0)))

    def flat_bf16(w):            # (K, Cin, Cout) -> (K*Cin, Cout) bf16 for the MXU
        kk, ci, co = w.shape
        return w.reshape(kk * ci, co).astype(jnp.bfloat16)

    w1f = flat_bf16(w1)
    w2f = flat_bf16(w2)
    # Layer-3 taps folded into the N dim: (K, H, Cout) -> (H, K*Cout).
    w3p = jnp.transpose(w3, (1, 0, 2)).reshape(H, K * Cout).astype(jnp.bfloat16)
    b1r, b2r, b3r = b1.reshape(1, -1), b2.reshape(1, -1), b3.reshape(1, -1)

    kernel = functools.partial(
        _fused_conv3_kernel, seq_len=L, padded_len=Lp, tile_len=TL,
        cout=Cout, ksize=K, neg_slope=NEG_SLOPE)

    const2 = lambda b, j: (0, 0)
    out = pl.pallas_call(
        kernel,
        out_shape=jax.ShapeDtypeStruct((B, Lp, Cout), x.dtype),
        grid_spec=pltpu.PrefetchScalarGridSpec(
            num_scalar_prefetch=0,
            grid=(B, nL),
            in_specs=[
                # Full row per batch element; index constant in j -> DMA'd once per b.
                pl.BlockSpec((1, Lp, Cin), lambda b, j: (b, 0, 0)),
                pl.BlockSpec((K * Cin, H), const2),
                pl.BlockSpec((1, H), const2),
                pl.BlockSpec((K * H, H), const2),
                pl.BlockSpec((1, H), const2),
                pl.BlockSpec((H, K * Cout), const2),
                pl.BlockSpec((1, Cout), const2),
            ],
            out_specs=pl.BlockSpec((1, TL, Cout), lambda b, j: (b, j, 0)),
            scratch_shapes=[pltpu.VMEM((Lp + 2 * HALO_X, Cin), x.dtype)],
        ),
        compiler_params=pltpu.CompilerParams(
            dimension_semantics=("parallel", "arbitrary"),
            vmem_limit_bytes=_vmem_limit_bytes(),
        ),
    )(x_in, w1f, b1r, w2f, b2r, w3p, b3r)
    return out if Lp == L else out[:, :L, :]


def init_params(key, input_dim, hidden_dim, output_dim):
    """Deterministic synthetic params. PyTorch Conv1d weight is (Cout, Cin, K);
    we store them in the kernel layout (K, Cin, Cout)."""
    ks = jax.random.split(key, 6)

    def mk(kw, kb, cin, cout):
        fan_in = cin * KSIZE
        scale = 1.0 / jnp.sqrt(fan_in)
        w = jax.random.uniform(kw, (KSIZE, cin, cout), jnp.float32, -scale, scale)
        b = jax.random.uniform(kb, (cout,), jnp.float32, -scale, scale)
        return w, b

    w1, b1 = mk(ks[0], ks[1], input_dim, hidden_dim)
    w2, b2 = mk(ks[2], ks[3], hidden_dim, hidden_dim)
    w3, b3 = mk(ks[4], ks[5], hidden_dim, output_dim)
    return (w1, b1), (w2, b2), (w3, b3)


def _reference_forward(x, params):
    """Pure-JAX f32 reference using lax.conv_general_dilated (NCL like PyTorch)."""
    def conv(x_blc, w_kio, b):
        w_oik = jnp.transpose(w_kio, (2, 1, 0))       # -> (Cout, Cin, K)
        x_bcl = jnp.transpose(x_blc, (0, 2, 1))
        y = lax.conv_general_dilated(
            x_bcl, w_oik, window_strides=(1,),
            padding=[(KSIZE // 2, KSIZE // 2)],
            dimension_numbers=("NCH", "OIH", "NCH"),
        ) + b[None, :, None]
        y = jnp.where(y >= 0, y, NEG_SLOPE * y)
        return jnp.transpose(y, (0, 2, 1))

    (w1, b1), (w2, b2), (w3, b3) = params
    x = conv(x, w1, b1)
    x = conv(x, w2, b2)
    x = conv(x, w3, b3)
    return x


if __name__ == "__main__":
    input_dim, hidden_dim, output_dim = 4, 32, 8
    key = jax.random.PRNGKey(0)
    kx, kp, kx2, kx3 = jax.random.split(key, 4)
    params = init_params(kp, input_dim, hidden_dim, output_dim)

    fwd = jax.jit(fully_conv_forward, static_argnames=("l_tile",))

    # 1) Small demo shape (single L tile per row).
    B, L = 2, 16
    x = jax.random.normal(kx, (B, L, input_dim), jnp.float32)
    out = jax.block_until_ready(fwd(x, params))
    ref = _reference_forward(x, params)
    assert out.shape == (B, L, output_dim)
    # bf16 MXU operands with f32 accumulation -> slightly loosened tolerance.
    assert jnp.allclose(out, ref, atol=2e-2, rtol=2e-2), "mismatch vs reference"

    # 2) Exercise the L-tiled (halo'd) path: grid = (B, L // l_tile), l_tile=32.
    B2, L2 = 2, 64
    x2 = jax.random.normal(kx2, (B2, L2, input_dim), jnp.float32)
    out2 = jax.block_until_ready(fwd(x2, params, l_tile=32))
    ref2 = _reference_forward(x2, params)
    assert jnp.allclose(out2, ref2, atol=2e-2, rtol=2e-2), "mismatch (tiled path)"

    # 3) Exercise the non-divisible-L padding path (L padded up to a TL multiple).
    B3, L3 = 1, 50
    x3 = jax.random.normal(kx3, (B3, L3, input_dim), jnp.float32)
    out3 = jax.block_until_ready(fwd(x3, params))
    ref3 = _reference_forward(x3, params)
    assert out3.shape == (B3, L3, output_dim)
    assert jnp.allclose(out3, ref3, atol=2e-2, rtol=2e-2), "mismatch (padded path)"

    print("KERNEL_OK")
</pallas_src>

<mosaic_0001>
module attributes {stable_mosaic.version = 11 : i64} {
  func.func @_fused_conv3_kernel(%arg0: i32, %arg1: i32, %arg2: memref<1x16x4xf32, #tpu.memory_space<vmem>>, %arg3: memref<44x32xbf16, #tpu.memory_space<vmem>>, %arg4: memref<1x32xf32, #tpu.memory_space<vmem>>, %arg5: memref<352x32xbf16, #tpu.memory_space<vmem>>, %arg6: memref<1x32xf32, #tpu.memory_space<vmem>>, %arg7: memref<32x88xbf16, #tpu.memory_space<vmem>>, %arg8: memref<1x8xf32, #tpu.memory_space<vmem>>, %arg9: memref<1x16x8xf32, #tpu.memory_space<vmem>>, %arg10: memref<64x4xf32, #tpu.memory_space<vmem>>) attributes {dimension_semantics = [#tpu.dimension_semantics<parallel>, #tpu.dimension_semantics<arbitrary>], iteration_bounds = array<i64: 2, 1>, scalar_prefetch = 0 : i64, scratch_operands = 1 : i64, tpu.core_type = #tpu.core_type<tc>, window_params = [{transform_indices = @transform_0, window_bounds = array<i64: 1, 16, 4>}, {pipeline_mode = #tpu.pipeline_mode<synchronous>, transform_indices = @transform_1, window_bounds = array<i64: 44, 32>}, {pipeline_mode = #tpu.pipeline_mode<synchronous>, transform_indices = @transform_2, window_bounds = array<i64: 1, 32>}, {pipeline_mode = #tpu.pipeline_mode<synchronous>, transform_indices = @transform_3, window_bounds = array<i64: 352, 32>}, {pipeline_mode = #tpu.pipeline_mode<synchronous>, transform_indices = @transform_4, window_bounds = array<i64: 1, 32>}, {pipeline_mode = #tpu.pipeline_mode<synchronous>, transform_indices = @transform_5, window_bounds = array<i64: 32, 88>}, {pipeline_mode = #tpu.pipeline_mode<synchronous>, transform_indices = @transform_6, window_bounds = array<i64: 1, 8>}, {transform_indices = @transform_7, window_bounds = array<i64: 1, 16, 8>}]} {
    %c0_i32 = arith.constant 0 : i32
    %0 = arith.cmpi eq, %arg1, %c0_i32 : i32
    %1 = arith.extui %0 : i1 to i32
    %c0_i32_0 = arith.constant 0 : i32
    %2 = arith.cmpi ne, %1, %c0_i32_0 : i32
    scf.if %2 {
      %cst_33 = arith.constant 0.000000e+00 : f32
      %118 = vector.broadcast %cst_33 : f32 to vector<24x4xf32>
      %c0_34 = arith.constant 0 : index
      %c0_35 = arith.constant 0 : index
      %119 = vector.load %arg10[%c0_34, %c0_35] : memref<64x4xf32, #tpu.memory_space<vmem>>, vector<24x4xf32>
      tpu.vector_store %arg10[%c0_34, %c0_35], %118 {strides = array<i32>} : memref<64x4xf32, #tpu.memory_space<vmem>>, vector<24x4xf32>,
      %c40 = arith.constant 40 : index
      %c0_36 = arith.constant 0 : index
      %120 = vector.load %arg10[%c40, %c0_36] : memref<64x4xf32, #tpu.memory_space<vmem>>, vector<24x4xf32>
      tpu.vector_store %arg10[%c40, %c0_36], %118 {strides = array<i32>} : memref<64x4xf32, #tpu.memory_space<vmem>>, vector<24x4xf32>,
      %c0_37 = arith.constant 0 : index
      %c0_38 = arith.constant 0 : index
      %c0_39 = arith.constant 0 : index
      %121 = vector.load %arg2[%c0_37, %c0_38, %c0_39] : memref<1x16x4xf32, #tpu.memory_space<vmem>>, vector<1x16x4xf32>
      %122 = vector.shape_cast %121 : vector<1x16x4xf32> to vector<16x4xf32>
      %c24 = arith.constant 24 : index
      %c0_40 = arith.constant 0 : index
      %123 = vector.load %arg10[%c24, %c0_40] : memref<64x4xf32, #tpu.memory_space<vmem>>, vector<16x4xf32>
      tpu.vector_store %arg10[%c24, %c0_40], %122 {strides = array<i32>} : memref<64x4xf32, #tpu.memory_space<vmem>>, vector<16x4xf32>,
    } else {
    }
    %c16_i32 = arith.constant 16 : i32
    %3 = arith.muli %arg1, %c16_i32 : i32
    %4 = tpu.assume_multiple %3, 8 : i32
    %5 = arith.index_cast %4 : i32 to index
    %c0 = arith.constant 0 : index
    %6 = vector.load %arg10[%5, %c0] : memref<64x4xf32, #tpu.memory_space<vmem>>, vector<64x4xf32>
    %7 = arith.truncf %6 : vector<64x4xf32> to vector<64x4xbf16>
    %8 = vector.extract_strided_slice %7 {offsets = [3, 0], sizes = [48, 4], strides = [1, 1]} : vector<64x4xbf16> to vector<48x4xbf16>
    %9 = vector.extract_strided_slice %7 {offsets = [4, 0], sizes = [48, 4], strides = [1, 1]} : vector<64x4xbf16> to vector<48x4xbf16>
    %10 = vector.extract_strided_slice %7 {offsets = [5, 0], sizes = [48, 4], strides = [1, 1]} : vector<64x4xbf16> to vector<48x4xbf16>
    %11 = vector.extract_strided_slice %7 {offsets = [6, 0], sizes = [48, 4], strides = [1, 1]} : vector<64x4xbf16> to vector<48x4xbf16>
    %12 = vector.extract_strided_slice %7 {offsets = [7, 0], sizes = [48, 4], strides = [1, 1]} : vector<64x4xbf16> to vector<48x4xbf16>
    %13 = vector.extract_strided_slice %7 {offsets = [8, 0], sizes = [48, 4], strides = [1, 1]} : vector<64x4xbf16> to vector<48x4xbf16>
    %14 = vector.extract_strided_slice %7 {offsets = [9, 0], sizes = [48, 4], strides = [1, 1]} : vector<64x4xbf16> to vector<48x4xbf16>
    %15 = vector.extract_strided_slice %7 {offsets = [10, 0], sizes = [48, 4], strides = [1, 1]} : vector<64x4xbf16> to vector<48x4xbf16>
    %16 = vector.extract_strided_slice %7 {offsets = [11, 0], sizes = [48, 4], strides = [1, 1]} : vector<64x4xbf16> to vector<48x4xbf16>
    %17 = vector.extract_strided_slice %7 {offsets = [12, 0], sizes = [48, 4], strides = [1, 1]} : vector<64x4xbf16> to vector<48x4xbf16>
    %18 = vector.extract_strided_slice %7 {offsets = [13, 0], sizes = [48, 4], strides = [1, 1]} : vector<64x4xbf16> to vector<48x4xbf16>
    %19 = tpu.concatenate %8, %9, %10, %11, %12, %13, %14, %15, %16, %17, %18 in 1 : vector<48x4xbf16>, vector<48x4xbf16>, vector<48x4xbf16>, vector<48x4xbf16>, vector<48x4xbf16>, vector<48x4xbf16>, vector<48x4xbf16>, vector<48x4xbf16>, vector<48x4xbf16>, vector<48x4xbf16>, vector<48x4xbf16> -> vector<48x44xbf16>
    %c0_1 = arith.constant 0 : index
    %c0_2 = arith.constant 0 : index
    %20 = vector.load %arg3[%c0_1, %c0_2] : memref<44x32xbf16, #tpu.memory_space<vmem>>, vector<44x32xbf16>
    %cst = arith.constant dense<0.000000e+00> : vector<48x32xf32>
    %21 = tpu.matmul %19, %20, %cst {dimension_numbers = #tpu.dot_dimension_numbers<[1], [0], [0], [1], [0, 0, 1, 1], [], []>} : vector<48x44xbf16>, vector<44x32xbf16>, vector<48x32xf32> -> vector<48x32xf32>
    %c0_3 = arith.constant 0 : index
    %c0_4 = arith.constant 0 : index
    %22 = vector.load %arg4[%c0_3, %c0_4] : memref<1x32xf32, #tpu.memory_space<vmem>>, vector<1x32xf32>
    %23 = vector.broadcast %22 : vector<1x32xf32> to vector<48x32xf32>
    %24 = arith.addf %21, %23 : vector<48x32xf32>
    %cst_5 = arith.constant 0.000000e+00 : f32
    %25 = vector.broadcast %cst_5 : f32 to vector<48x32xf32>
    %26 = arith.cmpf oge, %24, %25 : vector<48x32xf32>
    %cst_6 = arith.constant 1.000000e-01 : f32
    %27 = vector.broadcast %cst_6 : f32 to vector<48x32xf32>
    %28 = arith.mulf %27, %24 : vector<48x32xf32>
    %29 = arith.select %26, %24, %28 : vector<48x32xi1>, vector<48x32xf32>
    %c16_i32_7 = arith.constant 16 : i32
    %30 = arith.subi %4, %c16_i32_7 : i32
    %31 = tpu.iota {dimensions = array<i32: 0>} : vector<48x1xi32>
    %32 = vector.broadcast %30 : i32 to vector<48x1xi32>
    %33 = arith.addi %31, %32 : vector<48x1xi32>
    %c0_i32_8 = arith.constant 0 : i32
    %34 = vector.broadcast %c0_i32_8 : i32 to vector<48x1xi32>
    %35 = arith.cmpi sge, %33, %34 : vector<48x1xi32>
    %c16_i32_9 = arith.constant 16 : i32
    %36 = vector.broadcast %c16_i32_9 : i32 to vector<48x1xi32>
    %37 = arith.cmpi slt, %33, %36 : vector<48x1xi32>
    %38 = arith.andi %35, %37 : vector<48x1xi1>
    %cst_10 = arith.constant 0.000000e+00 : f32
    %39 = vector.shape_cast %38 : vector<48x1xi1> to vector<48x1xi1>
    %40 = vector.broadcast %39 : vector<48x1xi1> to vector<48x32xi1>
    %41 = vector.broadcast %cst_10 : f32 to vector<48x32xf32>
    %42 = arith.select %40, %29, %41 : vector<48x32xi1>, vector<48x32xf32>
    %43 = arith.truncf %42 : vector<48x32xf32> to vector<48x32xbf16>
    %44 = vector.extract_strided_slice %43 {offsets = [3, 0], sizes = [32, 32], strides = [1, 1]} : vector<48x32xbf16> to vector<32x32xbf16>
    %45 = vector.extract_strided_slice %43 {offsets = [4, 0], sizes = [32, 32], strides = [1, 1]} : vector<48x32xbf16> to vector<32x32xbf16>
    %46 = vector.extract_strided_slice %43 {offsets = [5, 0], sizes = [32, 32], strides = [1, 1]} : vector<48x32xbf16> to vector<32x32xbf16>
    %47 = vector.extract_strided_slice %43 {offsets = [6, 0], sizes = [32, 32], strides = [1, 1]} : vector<48x32xbf16> to vector<32x32xbf16>
    %48 = vector.extract_strided_slice %43 {offsets = [7, 0], sizes = [32, 32], strides = [1, 1]} : vector<48x32xbf16> to vector<32x32xbf16>
    %49 = vector.extract_strided_slice %43 {offsets = [8, 0], sizes = [32, 32], strides = [1, 1]} : vector<48x32xbf16> to vector<32x32xbf16>
    %50 = vector.extract_strided_slice %43 {offsets = [9, 0], sizes = [32, 32], strides = [1, 1]} : vector<48x32xbf16> to vector<32x32xbf16>
    %51 = vector.extract_strided_slice %43 {offsets = [10, 0], sizes = [32, 32], strides = [1, 1]} : vector<48x32xbf16> to vector<32x32xbf16>
    %52 = tpu.concatenate %44, %45, %46, %47, %48, %49, %50, %51 in 1 : vector<32x32xbf16>, vector<32x32xbf16>, vector<32x32xbf16>, vector<32x32xbf16>, vector<32x32xbf16>, vector<32x32xbf16>, vector<32x32xbf16>, vector<32x32xbf16> -> vector<32x256xbf16>
    %c0_11 = arith.constant 0 : index
    %c0_12 = arith.constant 0 : index
    %53 = vector.load %arg5[%c0_11, %c0_12] : memref<352x32xbf16, #tpu.memory_space<vmem>>, vector<256x32xbf16>
    %cst_13 = arith.constant dense<0.000000e+00> : vector<32x32xf32>
    %54 = tpu.matmul %52, %53, %cst_13 {dimension_numbers = #tpu.dot_dimension_numbers<[1], [0], [0], [1], [0, 0, 1, 1], [], []>} : vector<32x256xbf16>, vector<256x32xbf16>, vector<32x32xf32> -> vector<32x32xf32>
    %55 = vector.extract_strided_slice %43 {offsets = [11, 0], sizes = [32, 32], strides = [1, 1]} : vector<48x32xbf16> to vector<32x32xbf16>
    %56 = vector.extract_strided_slice %43 {offsets = [12, 0], sizes = [32, 32], strides = [1, 1]} : vector<48x32xbf16> to vector<32x32xbf16>
    %57 = vector.extract_strided_slice %43 {offsets = [13, 0], sizes = [32, 32], strides = [1, 1]} : vector<48x32xbf16> to vector<32x32xbf16>
    %58 = tpu.concatenate %55, %56, %57 in 1 : vector<32x32xbf16>, vector<32x32xbf16>, vector<32x32xbf16> -> vector<32x96xbf16>
    %c256 = arith.constant 256 : index
    %c0_14 = arith.constant 0 : index
    %59 = vector.load %arg5[%c256, %c0_14] : memref<352x32xbf16, #tpu.memory_space<vmem>>, vector<96x32xbf16>
    %cst_15 = arith.constant dense<0.000000e+00> : vector<32x32xf32>
    %60 = tpu.matmul %58, %59, %cst_15 {dimension_numbers = #tpu.dot_dimension_numbers<[1], [0], [0], [1], [0, 0, 1, 1], [], []>} : vector<32x96xbf16>, vector<96x32xbf16>, vector<32x32xf32> -> vector<32x32xf32>
    %61 = arith.addf %54, %60 : vector<32x32xf32>
    %c0_16 = arith.constant 0 : index
    %c0_17 = arith.constant 0 : index
    %62 = vector.load %arg6[%c0_16, %c0_17] : memref<1x32xf32, #tpu.memory_space<vmem>>, vector<1x32xf32>
    %63 = vector.broadcast %62 : vector<1x32xf32> to vector<32x32xf32>
    %64 = arith.addf %61, %63 : vector<32x32xf32>
    %cst_18 = arith.constant 0.000000e+00 : f32
    %65 = vector.broadcast %cst_18 : f32 to vector<32x32xf32>
    %66 = arith.cmpf oge, %64, %65 : vector<32x32xf32>
    %cst_19 = arith.constant 1.000000e-01 : f32
    %67 = vector.broadcast %cst_19 : f32 to vector<32x32xf32>
    %68 = arith.mulf %67, %64 : vector<32x32xf32>
    %69 = arith.select %66, %64, %68 : vector<32x32xi1>, vector<32x32xf32>
    %c8_i32 = arith.constant 8 : i32
    %70 = arith.subi %4, %c8_i32 : i32
    %71 = tpu.iota {dimensions = array<i32: 0>} : vector<32x1xi32>
    %72 = vector.broadcast %70 : i32 to vector<32x1xi32>
    %73 = arith.addi %71, %72 : vector<32x1xi32>
    %c0_i32_20 = arith.constant 0 : i32
    %74 = vector.broadcast %c0_i32_20 : i32 to vector<32x1xi32>
    %75 = arith.cmpi sge, %73, %74 : vector<32x1xi32>
    %c16_i32_21 = arith.constant 16 : i32
    %76 = vector.broadcast %c16_i32_21 : i32 to vector<32x1xi32>
    %77 = arith.cmpi slt, %73, %76 : vector<32x1xi32>
    %78 = arith.andi %75, %77 : vector<32x1xi1>
    %cst_22 = arith.constant 0.000000e+00 : f32
    %79 = vector.shape_cast %78 : vector<32x1xi1> to vector<32x1xi1>
    %80 = vector.broadcast %79 : vector<32x1xi1> to vector<32x32xi1>
    %81 = vector.broadcast %cst_22 : f32 to vector<32x32xf32>
    %82 = arith.select %80, %69, %81 : vector<32x32xi1>, vector<32x32xf32>
    %83 = arith.truncf %82 : vector<32x32xf32> to vector<32x32xbf16>
    %c0_23 = arith.constant 0 : index
    %c0_24 = arith.constant 0 : index
    %84 = vector.load %arg7[%c0_23, %c0_24] : memref<32x88xbf16, #tpu.memory_space<vmem>>, vector<32x88xbf16>
    %cst_25 = arith.constant dense<0.000000e+00> : vector<32x88xf32>
    %85 = tpu.matmul %83, %84, %cst_25 {dimension_numbers = #tpu.dot_dimension_numbers<[1], [0], [0], [1], [0, 0, 1, 1], [], []>} : vector<32x32xbf16>, vector<32x88xbf16>, vector<32x88xf32> -> vector<32x88xf32>
    %86 = vector.extract_strided_slice %85 {offsets = [3, 0], sizes = [16, 8], strides = [1, 1]} : vector<32x88xf32> to vector<16x8xf32>
    %87 = vector.extract_strided_slice %85 {offsets = [4, 8], sizes = [16, 8], strides = [1, 1]} : vector<32x88xf32> to vector<16x8xf32>
    %88 = arith.addf %86, %87 : vector<16x8xf32>
    %89 = vector.extract_strided_slice %85 {offsets = [5, 16], sizes = [16, 8], strides = [1, 1]} : vector<32x88xf32> to vector<16x8xf32>
    %90 = arith.addf %88, %89 : vector<16x8xf32>
    %91 = vector.extract_strided_slice %85 {offsets = [6, 24], sizes = [16, 8], strides = [1, 1]} : vector<32x88xf32> to vector<16x8xf32>
    %92 = arith.addf %90, %91 : vector<16x8xf32>
    %93 = vector.extract_strided_slice %85 {offsets = [7, 32], sizes = [16, 8], strides = [1, 1]} : vector<32x88xf32> to vector<16x8xf32>
    %94 = arith.addf %92, %93 : vector<16x8xf32>
    %95 = vector.extract_strided_slice %85 {offsets = [8, 40], sizes = [16, 8], strides = [1, 1]} : vector<32x88xf32> to vector<16x8xf32>
    %96 = arith.addf %94, %95 : vector<16x8xf32>
    %97 = vector.extract_strided_slice %85 {offsets = [9, 48], sizes = [16, 8], strides = [1, 1]} : vector<32x88xf32> to vector<16x8xf32>
    %98 = arith.addf %96, %97 : vector<16x8xf32>
    %99 = vector.extract_strided_slice %85 {offsets = [10, 56], sizes = [16, 8], strides = [1, 1]} : vector<32x88xf32> to vector<16x8xf32>
    %100 = arith.addf %98, %99 : vector<16x8xf32>
    %101 = vector.extract_strided_slice %85 {offsets = [11, 64], sizes = [16, 8], strides = [1, 1]} : vector<32x88xf32> to vector<16x8xf32>
    %102 = arith.addf %100, %101 : vector<16x8xf32>
    %103 = vector.extract_strided_slice %85 {offsets = [12, 72], sizes = [16, 8], strides = [1, 1]} : vector<32x88xf32> to vector<16x8xf32>
    %104 = arith.addf %102, %103 : vector<16x8xf32>
    %105 = vector.extract_strided_slice %85 {offsets = [13, 80], sizes = [16, 8], strides = [1, 1]} : vector<32x88xf32> to vector<16x8xf32>
    %106 = arith.addf %104, %105 : vector<16x8xf32>
    %c0_26 = arith.constant 0 : index
    %c0_27 = arith.constant 0 : index
    %107 = vector.load %arg8[%c0_26, %c0_27] : memref<1x8xf32, #tpu.memory_space<vmem>>, vector<1x8xf32>
    %108 = vector.broadcast %107 : vector<1x8xf32> to vector<16x8xf32>
    %109 = arith.addf %106, %108 : vector<16x8xf32>
    %cst_28 = arith.constant 0.000000e+00 : f32
    %110 = vector.broadcast %cst_28 : f32 to vector<16x8xf32>
    %111 = arith.cmpf oge, %109, %110 : vector<16x8xf32>
    %cst_29 = arith.constant 1.000000e-01 : f32
    %112 = vector.broadcast %cst_29 : f32 to vector<16x8xf32>
    %113 = arith.mulf %112, %109 : vector<16x8xf32>
    %114 = arith.select %111, %109, %113 : vector<16x8xi1>, vector<16x8xf32>
    %c0_30 = arith.constant 0 : index
    %c0_31 = arith.constant 0 : index
    %c0_32 = arith.constant 0 : index
    %115 = vector.load %arg9[%c0_30, %c0_31, %c0_32] : memref<1x16x8xf32, #tpu.memory_space<vmem>>, vector<1x16x8xf32>
    %116 = vector.shape_cast %115 : vector<1x16x8xf32> to vector<16x8xf32>
    %117 = vector.shape_cast %114 : vector<16x8xf32> to vector<1x16x8xf32>
    tpu.vector_store %arg9[%c0_30, %c0_31, %c0_32], %117 {strides = array<i32>} : memref<1x16x8xf32, #tpu.memory_space<vmem>>, vector<1x16x8xf32>,
    return
  }
  func.func @transform_0(%arg0: i32, %arg1: i32) -> (i32, i32, i32) {
    %c0_i32 = arith.constant 0 : i32
    %c0_i32_0 = arith.constant 0 : i32
    %c0_i32_1 = arith.constant 0 : i32
    return %arg0, %c0_i32, %c0_i32_0 : i32, i32, i32
  }
  func.func @transform_1(%arg0: i32, %arg1: i32) -> (i32, i32) {
    %c0_i32 = arith.constant 0 : i32
    %c0_i32_0 = arith.constant 0 : i32
    %c0_i32_1 = arith.constant 0 : i32
    return %c0_i32, %c0_i32_0 : i32, i32
  }
  func.func @transform_2(%arg0: i32, %arg1: i32) -> (i32, i32) {
    %c0_i32 = arith.constant 0 : i32
    %c0_i32_0 = arith.constant 0 : i32
    %c0_i32_1 = arith.constant 0 : i32
    return %c0_i32, %c0_i32_0 : i32, i32
  }
  func.func @transform_3(%arg0: i32, %arg1: i32) -> (i32, i32) {
    %c0_i32 = arith.constant 0 : i32
    %c0_i32_0 = arith.constant 0 : i32
    %c0_i32_1 = arith.constant 0 : i32
    return %c0_i32, %c0_i32_0 : i32, i32
  }
  func.func @transform_4(%arg0: i32, %arg1: i32) -> (i32, i32) {
    %c0_i32 = arith.constant 0 : i32
    %c0_i32_0 = arith.constant 0 : i32
    %c0_i32_1 = arith.constant 0 : i32
    return %c0_i32, %c0_i32_0 : i32, i32
  }
  func.func @transform_5(%arg0: i32, %arg1: i32) -> (i32, i32) {
    %c0_i32 = arith.constant 0 : i32
    %c0_i32_0 = arith.constant 0 : i32
    %c0_i32_1 = arith.constant 0 : i32
    return %c0_i32, %c0_i32_0 : i32, i32
  }
  func.func @transform_6(%arg0: i32, %arg1: i32) -> (i32, i32) {
    %c0_i32 = arith.constant 0 : i32
    %c0_i32_0 = arith.constant 0 : i32
    %c0_i32_1 = arith.constant 0 : i32
    return %c0_i32, %c0_i32_0 : i32, i32
  }
  func.func @transform_7(%arg0: i32, %arg1: i32) -> (i32, i32, i32) {
    %c0_i32 = arith.constant 0 : i32
    %c0_i32_0 = arith.constant 0 : i32
    return %arg0, %arg1, %c0_i32 : i32, i32, i32
  }
}

</mosaic_0001>

<llo_original>
// kernel: fully_conv_forward.1
$region0: #{fully_conv_forward.1}
  #allocation0 [shape = 'u32[]', space=smem, size = 0x4, offset = 0x4, fixed_abs, tag = 'smem constant byte address 0x4 - core index']
  #allocation1 [shape = 'u32[144,128]{1,0:T(1,128)}', space=vmem, size = 0x12000, scoped, tag = 'internal scratch']
  #allocation2 [shape = 'f32[64,4]{1,0:T(8,128)}', space=vmem, size = 0x8000, scoped, tag = 'scratch operand']
  %s0 = inlined_call_operand.vmem [shape: f32[2,16,4], index: 0, kind: input, shape index: {}]
  %s1 = inlined_call_operand.vmem [shape: bf16[44,32], index: 1, kind: input, shape index: {}]
  %s2 = inlined_call_operand.vmem [shape: f32[1,32], index: 2, kind: input, shape index: {}]
  %s3 = inlined_call_operand.vmem [shape: bf16[352,32], index: 3, kind: input, shape index: {}]
  %s4 = inlined_call_operand.vmem [shape: f32[1,32], index: 4, kind: input, shape index: {}]
  %s5 = inlined_call_operand.vmem [shape: bf16[32,88], index: 5, kind: input, shape index: {}]
  %s6 = inlined_call_operand.vmem [shape: f32[1,8], index: 6, kind: input, shape index: {}]
  %s7 = inlined_call_operand.vmem [shape: f32[2,16,8], index: 7, kind: output, shape index: {}]
  %s8 = sld [smem:[#allocation0]]
  $region65: #{fully_conv_forward.1} parent=0
    _
  %s10 = ssub.s32 1, %s8
  %s11 = scalar_select 0, %s10, %s8
  loop: start=0, step=1, limit=4
  $region2: #{fully_conv_forward.1} parent=0 // loop_pre_header
    _
  $region3: #{fully_conv_forward.1} parent=0 // loop_header
    %s13 = sphi 0, %s17
    %p14 = scmp.ge.s32.totalorder %s13, 4
    %s20 = sphi 0, %s32
    %s21 = sphi 0, %s28
    %s22 = sphi 0, %s20
    %s23 = sphi 0, %s21
    %s24 = sphi 0, %s22
    %s25 = sphi 0, %s23
    %s35 = sphi 0, %s37
    %s38 = sphi 0, %s35
    %s39 = sphi 0, %s38
    %s55 = sphi 0, %s39
    %s59 = sphi 0, %s59
    %s61 = sphi 0, %s59
    %s62 = sphi 0, %s61
    %s76 = sphi 0, %s62
    %s80 = sphi 0, %s80
    %s82 = sphi 0, %s80
    %s83 = sphi 0, %s82
    %s97 = sphi 0, %s83
    %s101 = sphi 0, %s101
    %s103 = sphi 0, %s101
    %s104 = sphi 0, %s103
    %s118 = sphi 0, %s104
    %s122 = sphi 0, %s122
    %s124 = sphi 0, %s122
    %s125 = sphi 0, %s124
    %s139 = sphi 0, %s125
    %s143 = sphi 0, %s143
    %s145 = sphi 0, %s143
    %s146 = sphi 0, %s145
    %s160 = sphi 0, %s146
    %s164 = sphi 0, %s164
    %s166 = sphi 0, %s164
    %s167 = sphi 0, %s166
    %s181 = sphi 0, %s167
    %s189 = sphi 0, %s191
    %s192 = sphi 0, %s189
    %s193 = sphi 0, %s192
    %s209 = sphi 0, %s193
  $region4: #{fully_conv_forward.1} parent=0 // loop_header_branch
    %16 = sbr.rel (%p14) target = $region8
  $region5: #{fully_conv_forward.1} parent=0 // loop_body
    %s18 = ssub.s32 %s13, 1
    %s19 = ssub.s32 %s13, 2
    %s26 = sadd.s32 1, %s21
    %p27 = scmp.ge.s32.totalorder %s26, 1
    %s28 = scalar_select %p27, 0, %s26
    %s29 = sadd.s32 1, %s20
    %s30 = scalar_select %p27, %s29, %s20
    %p31 = scmp.ge.s32.totalorder %s30, 2
    %s32 = scalar_select %p31, 0, %s30
    %s33 = ssub.s32 %s20, %s32
    %p34 = scmp.eq.s32.totalorder %s33, 0
    %s36 = sadd.s32 %s35, 1
    %s37 = scalar_select %p34, %s35, %s36
    %p40 = pneg %p34
    %p41 = scmp.eq.s32.totalorder %s13, 1
    %p42 = por %p40, %p41
    %p43 = scmp.ne.s32.totalorder %s35, %s38
    %p44 = scmp.eq.s32.totalorder %s13, 0
    %p45 = por %p43, %p44
    %p46 = scmp.ne.s32.totalorder %s35, %s38
    %p47 = scmp.eq.s32.totalorder %s18, 1
    %p48 = por %p46, %p47
    %p49 = scmp.ne.s32.totalorder %s38, %s39
    %p50 = scmp.eq.s32.totalorder %s18, 0
    %p51 = por %p49, %p50
    %p52 = scmp.ne.s32.totalorder %s38, %s39
    %p53 = scmp.eq.s32.totalorder %s19, 1
    %p54 = por %p52, %p53
    %p56 = scmp.ne.s32.totalorder %s39, %s55
    %p57 = scmp.eq.s32.totalorder %s19, 0
    %p58 = por %p56, %p57
    %s60 = sadd.s32 %s59, 1
    %p63 = scmp.eq.s32.totalorder %s13, 1
    %p64 = scmp.ne.s32.totalorder %s59, %s61
    %p65 = scmp.eq.s32.totalorder %s13, 0
    %p66 = por %p64, %p65
    %p67 = scmp.ne.s32.totalorder %s59, %s61
    %p68 = scmp.eq.s32.totalorder %s18, 1
    %p69 = por %p67, %p68
    %p70 = scmp.ne.s32.totalorder %s61, %s62
    %p71 = scmp.eq.s32.totalorder %s18, 0
    %p72 = por %p70, %p71
    %p73 = scmp.ne.s32.totalorder %s61, %s62
    %p74 = scmp.eq.s32.totalorder %s19, 1
    %p75 = por %p73, %p74
    %p77 = scmp.ne.s32.totalorder %s62, %s76
    %p78 = scmp.eq.s32.totalorder %s19, 0
    %p79 = por %p77, %p78
    %s81 = sadd.s32 %s80, 1
    %p84 = scmp.eq.s32.totalorder %s13, 1
    %p85 = scmp.ne.s32.totalorder %s80, %s82
    %p86 = scmp.eq.s32.totalorder %s13, 0
    %p87 = por %p85, %p86
    %p88 = scmp.ne.s32.totalorder %s80, %s82
    %p89 = scmp.eq.s32.totalorder %s18, 1
    %p90 = por %p88, %p89
    %p91 = scmp.ne.s32.totalorder %s82, %s83
    %p92 = scmp.eq.s32.totalorder %s18, 0
    %p93 = por %p91, %p92
    %p94 = scmp.ne.s32.totalorder %s82, %s83
    %p95 = scmp.eq.s32.totalorder %s19, 1
    %p96 = por %p94, %p95
    %p98 = scmp.ne.s32.totalorder %s83, %s97
    %p99 = scmp.eq.s32.totalorder %s19, 0
    %p100 = por %p98, %p99
    %s102 = sadd.s32 %s101, 1
    %p105 = scmp.eq.s32.totalorder %s13, 1
    %p106 = scmp.ne.s32.totalorder %s101, %s103
    %p107 = scmp.eq.s32.totalorder %s13, 0
    %p108 = por %p106, %p107
    %p109 = scmp.ne.s32.totalorder %s101, %s103
    %p110 = scmp.eq.s32.totalorder %s18, 1
    %p111 = por %p109, %p110
    %p112 = scmp.ne.s32.totalorder %s103, %s104
    %p113 = scmp.eq.s32.totalorder %s18, 0
    %p114 = por %p112, %p113
    %p115 = scmp.ne.s32.totalorder %s103, %s104
    %p116 = scmp.eq.s32.totalorder %s19, 1
    %p117 = por %p115, %p116
    %p119 = scmp.ne.s32.totalorder %s104, %s118
    %p120 = scmp.eq.s32.totalorder %s19, 0
    %p121 = por %p119, %p120
    %s123 = sadd.s32 %s122, 1
    %p126 = scmp.eq.s32.totalorder %s13, 1
    %p127 = scmp.ne.s32.totalorder %s122, %s124
    %p128 = scmp.eq.s32.totalorder %s13, 0
    %p129 = por %p127, %p128
    %p130 = scmp.ne.s32.totalorder %s122, %s124
    %p131 = scmp.eq.s32.totalorder %s18, 1
    %p132 = por %p130, %p131
    %p133 = scmp.ne.s32.totalorder %s124, %s125
    %p134 = scmp.eq.s32.totalorder %s18, 0
    %p135 = por %p133, %p134
    %p136 = scmp.ne.s32.totalorder %s124, %s125
    %p137 = scmp.eq.s32.totalorder %s19, 1
    %p138 = por %p136, %p137
    %p140 = scmp.ne.s32.totalorder %s125, %s139
    %p141 = scmp.eq.s32.totalorder %s19, 0
    %p142 = por %p140, %p141
    %s144 = sadd.s32 %s143, 1
    %p147 = scmp.eq.s32.totalorder %s13, 1
    %p148 = scmp.ne.s32.totalorder %s143, %s145
    %p149 = scmp.eq.s32.totalorder %s13, 0
    %p150 = por %p148, %p149
    %p151 = scmp.ne.s32.totalorder %s143, %s145
    %p152 = scmp.eq.s32.totalorder %s18, 1
    %p153 = por %p151, %p152
    %p154 = scmp.ne.s32.totalorder %s145, %s146
    %p155 = scmp.eq.s32.totalorder %s18, 0
    %p156 = por %p154, %p155
    %p157 = scmp.ne.s32.totalorder %s145, %s146
    %p158 = scmp.eq.s32.totalorder %s19, 1
    %p159 = por %p157, %p158
    %p161 = scmp.ne.s32.totalorder %s146, %s160
    %p162 = scmp.eq.s32.totalorder %s19, 0
    %p163 = por %p161, %p162
    %s165 = sadd.s32 %s164, 1
    %p168 = scmp.eq.s32.totalorder %s13, 1
    %p169 = scmp.ne.s32.totalorder %s164, %s166
    %p170 = scmp.eq.s32.totalorder %s13, 0
    %p171 = por %p169, %p170
    %p172 = scmp.ne.s32.totalorder %s164, %s166
    %p173 = scmp.eq.s32.totalorder %s18, 1
    %p174 = por %p172, %p173
    %p175 = scmp.ne.s32.totalorder %s166, %s167
    %p176 = scmp.eq.s32.totalorder %s18, 0
    %p177 = por %p175, %p176
    %p178 = scmp.ne.s32.totalorder %s166, %s167
    %p179 = scmp.eq.s32.totalorder %s19, 1
    %p180 = por %p178, %p179
    %p182 = scmp.ne.s32.totalorder %s167, %s181
    %p183 = scmp.eq.s32.totalorder %s19, 0
    %p184 = por %p182, %p183
    %s185 = ssub.s32 %s20, %s32
    %s186 = ssub.s32 %s21, %s28
    %s187 = sor.u32 %s185, %s186
    %p188 = scmp.eq.s32.totalorder %s187, 0
    %s190 = sadd.s32 %s189, 1
    %s191 = scalar_select %p188, %s189, %s190
    %p194 = pneg %p188
    %p195 = scmp.eq.s32.totalorder %s13, 1
    %p196 = por %p194, %p195
    %p197 = scmp.ne.s32.totalorder %s189, %s192
    %p198 = scmp.eq.s32.totalorder %s13, 0
    %p199 = por %p197, %p198
    %p200 = scmp.ne.s32.totalorder %s189, %s192
    %p201 = scmp.eq.s32.totalorder %s18, 1
    %p202 = por %p200, %p201
    %p203 = scmp.ne.s32.totalorder %s192, %s193
    %p204 = scmp.eq.s32.totalorder %s18, 0
    %p205 = por %p203, %p204
    %p206 = scmp.ne.s32.totalorder %s192, %s193
    %p207 = scmp.eq.s32.totalorder %s19, 1
    %p208 = por %p206, %p207
    %p210 = scmp.ne.s32.totalorder %s193, %s209
    %p211 = scmp.eq.s32.totalorder %s19, 0
    %p212 = por %p210, %p211
    %p213 = scmp.le.s32.totalorder 1, %s13
    %p214 = scmp.lt.s32.totalorder %s13, 3
    %p215 = pnand %p213, %p214
    %p216 = pneg %p215
    // Predicated region
    $region9: #{fully_conv_forward.1} parent=5 // pred_check
      _
    $region10: #{fully_conv_forward.1} parent=5 // pred_check_branch
      %218 = sbr.rel (%p215) target = $region12
    $region11: #{fully_conv_forward.1} parent=5 // pred_region
      %s219 = ssub.s32 %s13, 1
      // Predicated region
      $region13: #{fully_conv_forward.1} parent=11 // pred_check
        %p220 = pneg %p72
      $region14: #{fully_conv_forward.1} parent=11 // pred_check_branch
        %222 = sbr.rel (%p220) target = $region16
      $region15: #{fully_conv_forward.1} parent=11 // pred_region
        _
      $region16: #{fully_conv_forward.1} parent=11 // pred_fallthru
        _
      // Predicated region
      $region17: #{fully_conv_forward.1} parent=11 // pred_check
        %p223 = pneg %p93
      $region18: #{fully_conv_forward.1} parent=11 // pred_check_branch
        %225 = sbr.rel (%p223) target = $region20
      $region19: #{fully_conv_forward.1} parent=11 // pred_region
        _
      $region20: #{fully_conv_forward.1} parent=11 // pred_fallthru
        _
      // Predicated region
      $region21: #{fully_conv_forward.1} parent=11 // pred_check
        %p226 = pneg %p114
      $region22: #{fully_conv_forward.1} parent=11 // pred_check_branch
        %228 = sbr.rel (%p226) target = $region24
      $region23: #{fully_conv_forward.1} parent=11 // pred_region
        _
      $region24: #{fully_conv_forward.1} parent=11 // pred_fallthru
        _
      // Predicated region
      $region25: #{fully_conv_forward.1} parent=11 // pred_check
        %p229 = pneg %p135
      $region26: #{fully_conv_forward.1} parent=11 // pred_check_branch
        %231 = sbr.rel (%p229) target = $region28
      $region27: #{fully_conv_forward.1} parent=11 // pred_region
        _
      $region28: #{fully_conv_forward.1} parent=11 // pred_fallthru
        _
      // Predicated region
      $region29: #{fully_conv_forward.1} parent=11 // pred_check
        %p232 = pneg %p156
      $region30: #{fully_conv_forward.1} parent=11 // pred_check_branch
        %234 = sbr.rel (%p232) target = $region32
      $region31: #{fully_conv_forward.1} parent=11 // pred_region
        _
      $region32: #{fully_conv_forward.1} parent=11 // pred_fallthru
        _
      // Predicated region
      $region33: #{fully_conv_forward.1} parent=11 // pred_check
        %p235 = pneg %p177
      $region34: #{fully_conv_forward.1} parent=11 // pred_check_branch
        %237 = sbr.rel (%p235) target = $region36
      $region35: #{fully_conv_forward.1} parent=11 // pred_region
        _
      $region36: #{fully_conv_forward.1} parent=11 // pred_fallthru
        _
    $region12: #{fully_conv_forward.1} parent=5 // pred_fallthru
      _
    %p238 = scmp.lt.s32.totalorder %s13, 2
    // Predicated region
    $region37: #{fully_conv_forward.1} parent=5 // pred_check
      %p239 = pneg %p238
    $region38: #{fully_conv_forward.1} parent=5 // pred_check_branch
      %241 = sbr.rel (%p239) target = $region40
    $region39: #{fully_conv_forward.1} parent=5 // pred_region
      // Predicated region
      $region41: #{fully_conv_forward.1} parent=39 // pred_check
        %p242 = pneg %p45
      $region42: #{fully_conv_forward.1} parent=39 // pred_check_branch
        %244 = sbr.rel (%p242) target = $region44
      $region43: #{fully_conv_forward.1} parent=39 // pred_region
        %p245 = scmp.lt.s32.totalorder %s20, 1
        %s246 = scalar_select %p245, %s20, 1
        %s247 = smul.addr %s246, 2
        %s248 = smul.addr %s247, 8
        %s249 = scalar_lea.vmem %s0, %s248
      $region44: #{fully_conv_forward.1} parent=39 // pred_fallthru
        _
    $region40: #{fully_conv_forward.1} parent=5 // pred_fallthru
      _
    %p250 = scmp.le.s32.totalorder 1, %s13
    %p251 = scmp.lt.s32.totalorder %s13, 3
    %p252 = pnand %p250, %p251
    %p253 = pneg %p252
    // Predicated region
    $region45: #{fully_conv_forward.1} parent=5 // pred_check
      _
    $region46: #{fully_conv_forward.1} parent=5 // pred_check_branch
      %255 = sbr.rel (%p252) target = $region48
    $region47: #{fully_conv_forward.1} parent=5 // pred_region
      %s256 = ssub.s32 %s13, 1
      %p257 = scmp.lt.s32.totalorder %s22, 1
      %s258 = scalar_select %p257, %s22, 1
      %s259 = smul.addr %s258, 2
      %s260 = smul.addr %s259, 8
      %s261 = scalar_lea.vmem %s0, %s260
      %p262 = pneg %p51
      %p263 = pneg %p48
      %p264 = pneg %p72
      %p265 = pneg %p69
      %p266 = pneg %p93
      %p267 = pneg %p90
      %p268 = pneg %p114
      %p269 = pneg %p111
      %p270 = pneg %p135
      %p271 = pneg %p132
      %p272 = pneg %p156
      %p273 = pneg %p153
      %p274 = pneg %p177
      %p275 = pneg %p174
      %p276 = pneg %p205
      %p277 = pneg %p202
      %s278 = smul.u32 2, %s23
      %p279 = scmp.lt.s32.totalorder %s22, 1
      %s280 = scalar_select %p279, %s22, 1
      %p281 = scmp.lt.s32.totalorder %s278, 1
      %s282 = scalar_select %p281, %s278, 1
      %s283 = smul.addr %s280, 2
      %s284 = sadd.s32 %s282, %s283
      %s285 = smul.addr %s284, 8
      %s286 = scalar_lea.vmem %s7, %s285
      %p287 = scmp.lt.s32.totalorder %s22, 1
      %s288 = scalar_select %p287, %s22, 1
      %s289 = smul.addr %s288, 2
      %s290 = smul.addr %s289, 8
      %s291 = scalar_lea.vmem %s0, %s290
      %s292 = smul.u32 2, %s23
      %p293 = scmp.lt.s32.totalorder %s22, 1
      %s294 = scalar_select %p293, %s22, 1
      %p295 = scmp.lt.s32.totalorder %s292, 1
      %s296 = scalar_select %p295, %s292, 1
      %s297 = smul.addr %s294, 2
      %s298 = sadd.s32 %s296, %s297
      %s299 = smul.addr %s298, 8
      %s300 = scalar_lea.vmem %s7, %s299
      %s301 = smul.u32 2, %s23
      %p303 = scmp.eq.s32.totalorder %s23, 0
      // Predicated region
      $region49: #{fully_conv_forward.1} parent=47 // pred_check
        %p304 = pneg %p303
      $region50: #{fully_conv_forward.1} parent=47 // pred_check_branch
        %306 = sbr.rel (%p304) target = $region52
      $region51: #{fully_conv_forward.1} parent=47 // pred_region
        %vm307 = vcmask 31744
        %308 = vst.msk [vmem:[#allocation2] sm:$0xff] %vm307, 0.0
        %309 = vst.msk [vmem:[#allocation2 + $0x8] sm:$0xff] %vm307, 0.0
        %310 = vst.msk [vmem:[#allocation2 + $0x10] sm:$0xff] %vm307, 0.0
        %311 = vst.msk [vmem:[#allocation2 + $0x28] sm:$0xff] %vm307, 0.0
        %312 = vst.msk [vmem:[#allocation2 + $0x30] sm:$0xff] %vm307, 0.0
        %313 = vst.msk [vmem:[#allocation2 + $0x38] sm:$0xff] %vm307, 0.0
        %v314 = vld [vmem:[%s291] sm:$0xff]
        %v315 = vld [vmem:[%s291 + $0x8] sm:$0xff]
        %316 = vst.msk [vmem:[#allocation2 + $0x18] sm:$0xff] %vm307, %v314
        %317 = vst.msk [vmem:[#allocation2 + $0x20] sm:$0xff] %vm307, %v315
      $region52: #{fully_conv_forward.1} parent=47 // pred_fallthru
        _
      %s318 = smul.u32 %s23, 16
      %s319 = scalar_lea.vmem [#allocation2], %s318
      %v320 = vld [vmem:[%s319] sm:$0xff]
      %v321 = vld [vmem:[%s319 + $0x8] sm:$0xff]
      %v322 = vld [vmem:[%s319 + $0x10] sm:$0xff]
      %v323 = vld [vmem:[%s319 + $0x18] sm:$0xff]
      %v324 = vld [vmem:[%s319 + $0x20] sm:$0xff]
      %v325 = vld [vmem:[%s319 + $0x28] sm:$0xff]
      %v326 = vld [vmem:[%s319 + $0x30] sm:$0xff]
      %v327 = vld [vmem:[%s319 + $0x38] sm:$0xff]
      %v328 = vpack.c.bf16 %v321, %v320
      %v329 = vpack.c.bf16 %v323, %v322
      %v330 = vpack.c.bf16 %v325, %v324
      %v331 = vpack.c.bf16 %v327, %v326
      %vm332 = vsmask.f32 7424
      %v334 = vshrl.u32 %v328, 16
      %v336 = vshll.u32 %v328, 16
      %v338 = vrot.slane %v336, 1
      %v339 = vor.u32 %v334, %v338
      %v341 = vshll.u32 %v329, 16
      %v343 = vrot.slane %v341, 1
      %v344 = vsel %vm332, %v339, %v343
      %v345 = vshrl.u32 %v329, 16
      %v347 = vor.u32 %v345, %v343
      %v349 = vshll.u32 %v330, 16
      %v351 = vrot.slane %v349, 1
      %v352 = vsel %vm332, %v347, %v351
      %v353 = vshrl.u32 %v330, 16
      %v355 = vor.u32 %v353, %v351
      %v357 = vshll.u32 %v331, 16
      %v359 = vrot.slane %v357, 1
      %v360 = vsel %vm332, %v355, %v359
      %v361 = vshrl.u32 %v331, 16
      %v363 = vor.u32 %v361, %v359
      %364 = vrot.lane.b32.xlu0 %v344, 4
      %v365 = vpop.permute.xlu0 %364
      %366 = vrot.lane.b32.xlu0 %v352, 4
      %v367 = vpop.permute.xlu0 %366
      %368 = vrot.lane.b32.xlu0 %v360, 4
      %v369 = vpop.permute.xlu0 %368
      %370 = vrot.lane.b32.xlu0 %v363, 4
      %v371 = vpop.permute.xlu0 %370
      %vm376 = vcmask 1046528
      %v377 = vrot.slane %v328, 1
      %v378 = vrot.slane %v329, 1
      %v379 = vsel %vm376, %v377, %v378
      %v380 = vrot.slane %v330, 1
      %v381 = vsel %vm376, %v378, %v380
      %v382 = vrot.slane %v331, 1
      %v383 = vsel %vm376, %v380, %v382
      %384 = vrot.lane.b32.xlu0 %v379, 8
      %v385 = vpop.permute.xlu0 %384
      %386 = vrot.lane.b32.xlu0 %v381, 8
      %v387 = vpop.permute.xlu0 %386
      %388 = vrot.lane.b32.xlu0 %v383, 8
      %v389 = vpop.permute.xlu0 %388
      %390 = vrot.lane.b32.xlu0 %v382, 8
      %v391 = vpop.permute.xlu0 %390
      %vm392 = vsmask.f32 6400
      %v393 = vrot.slane %v334, 1
      %v394 = vrot.slane %v336, 2
      %v395 = vor.u32 %v393, %v394
      %v396 = vrot.slane %v345, 1
      %v397 = vrot.slane %v341, 2
      %v398 = vor.u32 %v396, %v397
      %v399 = vsel %vm392, %v395, %v398
      %v400 = vrot.slane %v353, 1
      %v401 = vrot.slane %v349, 2
      %v402 = vor.u32 %v400, %v401
      %v403 = vsel %vm392, %v398, %v402
      %v404 = vrot.slane %v361, 1
      %v405 = vrot.slane %v357, 2
      %v406 = vor.u32 %v404, %v405
      %v407 = vsel %vm392, %v402, %v406
      %408 = vrot.lane.b32.xlu0 %v399, 12
      %v409 = vpop.permute.xlu0 %408
      %410 = vrot.lane.b32.xlu0 %v403, 12
      %v411 = vpop.permute.xlu0 %410
      %412 = vrot.lane.b32.xlu0 %v407, 12
      %v413 = vpop.permute.xlu0 %412
      %414 = vrot.lane.b32.xlu0 %v406, 12
      %v415 = vpop.permute.xlu0 %414
      %vm416 = vcmask 1045504
      %v417 = vrot.slane %v328, 2
      %v418 = vrot.slane %v329, 2
      %v419 = vsel %vm416, %v417, %v418
      %v420 = vrot.slane %v330, 2
      %v421 = vsel %vm416, %v418, %v420
      %v422 = vrot.slane %v331, 2
      %v423 = vsel %vm416, %v420, %v422
      %424 = vrot.lane.b32.xlu0 %v419, 16
      %v425 = vpop.permute.xlu0 %424
      %426 = vrot.lane.b32.xlu0 %v421, 16
      %v427 = vpop.permute.xlu0 %426
      %428 = vrot.lane.b32.xlu0 %v423, 16
      %v429 = vpop.permute.xlu0 %428
      %430 = vrot.lane.b32.xlu0 %v422, 16
      %v431 = vpop.permute.xlu0 %430
      %vm432 = vsmask.f32 5376
      %v433 = vrot.slane %v334, 2
      %v434 = vrot.slane %v336, 3
      %v435 = vor.u32 %v433, %v434
      %v436 = vrot.slane %v345, 2
      %v437 = vrot.slane %v341, 3
      %v438 = vor.u32 %v436, %v437
      %v439 = vsel %vm432, %v435, %v438
      %v440 = vrot.slane %v353, 2
      %v441 = vrot.slane %v349, 3
      %v442 = vor.u32 %v440, %v441
      %v443 = vsel %vm432, %v438, %v442
      %v444 = vrot.slane %v361, 2
      %v445 = vrot.slane %v357, 3
      %v446 = vor.u32 %v444, %v445
      %v447 = vsel %vm432, %v442, %v446
      %448 = vrot.lane.b32.xlu0 %v439, 20
      %v449 = vpop.permute.xlu0 %448
      %450 = vrot.lane.b32.xlu0 %v443, 20
      %v451 = vpop.permute.xlu0 %450
      %452 = vrot.lane.b32.xlu0 %v447, 20
      %v453 = vpop.permute.xlu0 %452
      %454 = vrot.lane.b32.xlu0 %v446, 20
      %v455 = vpop.permute.xlu0 %454
      %vm456 = vcmask 1044480
      %v457 = vrot.slane %v328, 3
      %v458 = vrot.slane %v329, 3
      %v459 = vsel %vm456, %v457, %v458
      %v460 = vrot.slane %v330, 3
      %v461 = vsel %vm456, %v458, %v460
      %v462 = vrot.slane %v331, 3
      %v463 = vsel %vm456, %v460, %v462
      %464 = vrot.lane.b32.xlu0 %v459, 24
      %v465 = vpop.permute.xlu0 %464
      %466 = vrot.lane.b32.xlu0 %v461, 24
      %v467 = vpop.permute.xlu0 %466
      %468 = vrot.lane.b32.xlu0 %v463, 24
      %v469 = vpop.permute.xlu0 %468
      %470 = vrot.lane.b32.xlu0 %v462, 24
      %v471 = vpop.permute.xlu0 %470
      %vm472 = vsmask.f32 4352
      %v473 = vrot.slane %v334, 3
      %v474 = vrot.slane %v336, 4
      %v475 = vor.u32 %v473, %v474
      %v476 = vrot.slane %v345, 3
      %v477 = vrot.slane %v341, 4
      %v478 = vor.u32 %v476, %v477
      %v479 = vsel %vm472, %v475, %v478
      %v480 = vrot.slane %v353, 3
      %v481 = vrot.slane %v349, 4
      %v482 = vor.u32 %v480, %v481
      %v483 = vsel %vm472, %v478, %v482
      %v484 = vrot.slane %v361, 3
      %v485 = vrot.slane %v357, 4
      %v486 = vor.u32 %v484, %v485
      %v487 = vsel %vm472, %v482, %v486
      %488 = vrot.lane.b32.xlu0 %v479, 28
      %v489 = vpop.permute.xlu0 %488
      %490 = vrot.lane.b32.xlu0 %v483, 28
      %v491 = vpop.permute.xlu0 %490
      %492 = vrot.lane.b32.xlu0 %v487, 28
      %v493 = vpop.permute.xlu0 %492
      %494 = vrot.lane.b32.xlu0 %v486, 28
      %v495 = vpop.permute.xlu0 %494
      %vm496 = vcmask 1043456
      %v497 = vrot.slane %v328, 4
      %v498 = vrot.slane %v329, 4
      %v499 = vsel %vm496, %v497, %v498
      %v500 = vrot.slane %v330, 4
      %v501 = vsel %vm496, %v498, %v500
      %v502 = vrot.slane %v331, 4
      %v503 = vsel %vm496, %v500, %v502
      %504 = vrot.lane.b32.xlu0 %v499, 32
      %v505 = vpop.permute.xlu0 %504
      %506 = vrot.lane.b32.xlu0 %v501, 32
      %v507 = vpop.permute.xlu0 %506
      %508 = vrot.lane.b32.xlu0 %v503, 32
      %v509 = vpop.permute.xlu0 %508
      %510 = vrot.lane.b32.xlu0 %v502, 32
      %v511 = vpop.permute.xlu0 %510
      %vm512 = vsmask.f32 3328
      %v513 = vrot.slane %v334, 4
      %v514 = vrot.slane %v336, 5
      %v515 = vor.u32 %v513, %v514
      %v516 = vrot.slane %v345, 4
      %v517 = vrot.slane %v341, 5
      %v518 = vor.u32 %v516, %v517
      %v519 = vsel %vm512, %v515, %v518
      %v520 = vrot.slane %v353, 4
      %v521 = vrot.slane %v349, 5
      %v522 = vor.u32 %v520, %v521
      %v523 = vsel %vm512, %v518, %v522
      %v524 = vrot.slane %v361, 4
      %v525 = vrot.slane %v357, 5
      %v526 = vor.u32 %v524, %v525
      %v527 = vsel %vm512, %v522, %v526
      %528 = vrot.lane.b32.xlu0 %v519, 36
      %v529 = vpop.permute.xlu0 %528
      %530 = vrot.lane.b32.xlu0 %v523, 36
      %v531 = vpop.permute.xlu0 %530
      %532 = vrot.lane.b32.xlu0 %v527, 36
      %v533 = vpop.permute.xlu0 %532
      %534 = vrot.lane.b32.xlu0 %v526, 36
      %v535 = vpop.permute.xlu0 %534
      %vm536 = vcmask 1042432
      %v537 = vrot.slane %v328, 5
      %v538 = vrot.slane %v329, 5
      %v539 = vsel %vm536, %v537, %v538
      %v540 = vrot.slane %v330, 5
      %v541 = vsel %vm536, %v538, %v540
      %v542 = vrot.slane %v331, 5
      %v543 = vsel %vm536, %v540, %v542
      %544 = vrot.lane.b32.xlu0 %v539, 40
      %v545 = vpop.permute.xlu0 %544
      %546 = vrot.lane.b32.xlu0 %v541, 40
      %v547 = vpop.permute.xlu0 %546
      %548 = vrot.lane.b32.xlu0 %v543, 40
      %v549 = vpop.permute.xlu0 %548
      %550 = vrot.lane.b32.xlu0 %v542, 40
      %v551 = vpop.permute.xlu0 %550
      %vm552 = vcmask 31744
      %v554 = vsel %vm552, %v328, %v365
      %v556 = vsel %vm552, %v329, %v367
      %v558 = vsel %vm552, %v330, %v369
      %v560 = vsel %vm552, %v331, %v371
      %vm561 = vcmask 64512
      %v563 = vsel %vm561, %v554, %v385
      %v565 = vsel %vm561, %v556, %v387
      %v567 = vsel %vm561, %v558, %v389
      %v569 = vsel %vm561, %v560, %v391
      %vm570 = vcmask 97280
      %v572 = vsel %vm570, %v563, %v409
      %v574 = vsel %vm570, %v565, %v411
      %v576 = vsel %vm570, %v567, %v413
      %v578 = vsel %vm570, %v569, %v415
      %vm579 = vcmask 130048
      %v581 = vsel %vm579, %v572, %v425
      %v583 = vsel %vm579, %v574, %v427
      %v585 = vsel %vm579, %v576, %v429
      %v587 = vsel %vm579, %v578, %v431
      %vm588 = vcmask 162816
      %v590 = vsel %vm588, %v581, %v449
      %v592 = vsel %vm588, %v583, %v451
      %v594 = vsel %vm588, %v585, %v453
      %v596 = vsel %vm588, %v587, %v455
      %vm597 = vcmask 195584
      %v599 = vsel %vm597, %v590, %v465
      %v601 = vsel %vm597, %v592, %v467
      %v603 = vsel %vm597, %v594, %v469
      %v605 = vsel %vm597, %v596, %v471
      %vm606 = vcmask 228352
      %v608 = vsel %vm606, %v599, %v489
      %v610 = vsel %vm606, %v601, %v491
      %v612 = vsel %vm606, %v603, %v493
      %v614 = vsel %vm606, %v605, %v495
      %vm615 = vcmask 261120
      %v617 = vsel %vm615, %v608, %v505
      %v619 = vsel %vm615, %v610, %v507
      %v621 = vsel %vm615, %v612, %v509
      %v623 = vsel %vm615, %v614, %v511
      %vm624 = vcmask 293888
      %v626 = vsel %vm624, %v617, %v529
      %v628 = vsel %vm624, %v619, %v531
      %v630 = vsel %vm624, %v621, %v533
      %v632 = vsel %vm624, %v623, %v535
      %vm633 = vcmask 326656
      %v635 = vsel %vm633, %v626, %v545
      %v637 = vsel %vm633, %v628, %v547
      %v639 = vsel %vm633, %v630, %v549
      %v641 = vsel %vm633, %v632, %v551
      %v642 = vld [vmem:[%s1] sm:$0xf]
      %v643 = vld [vmem:[%s1 + $0x4] sm:$0xf]
      %v644 = vld [vmem:[%s1 + $0x8] sm:$0xf]
      %v645 = vld [vmem:[%s1 + $0xc] sm:$0xf]
      %v646 = vld [vmem:[%s1 + $0x10] sm:$0xf]
      %v647 = vld [vmem:[%s1 + $0x14] sm:$0x3]
      %v648 = vld [vmem:[%s2] sm:$0x1]
      %v650 = vlaneseq
      %v651 = vshrl.u32 %v650, 7
      %v652 = vsub.s32 0, %v651
      %v653 = vrot.slane %v648, %v652
      %v655 = vshrl.u32 %v635, 16
      %v657 = vrot.slane %v655, 1
      %v658 = vshll.u32 %v635, 16
      %v660 = vrot.slane %v658, 2
      %v661 = vor.u32 %v657, %v660
      %v662 = vshrl.u32 %v637, 16
      %v664 = vrot.slane %v662, 1
      %v665 = vshll.u32 %v637, 16
      %v667 = vrot.slane %v665, 2
      %v668 = vor.u32 %v664, %v667
      %v669 = vsel %vm392, %v661, %v668
      %v670 = vshrl.u32 %v639, 16
      %v672 = vrot.slane %v670, 1
      %v673 = vshll.u32 %v639, 16
      %v675 = vrot.slane %v673, 2
      %v676 = vor.u32 %v672, %v675
      %v677 = vsel %vm392, %v668, %v676
      %v678 = vshrl.u32 %v641, 16
      %v680 = vrot.slane %v678, 1
      %v681 = vshll.u32 %v641, 16
      %v683 = vrot.slane %v681, 2
      %v684 = vor.u32 %v680, %v683
      %v685 = vsel %vm392, %v676, %v684
      %v692 = vunpack.c.l.b16 %v642
      %v693 = vunpack.c.l.b16 %v643
      %v694 = vunpack.c.l.b16 %v644
      %v695 = vunpack.c.l.b16 %v645
      %v696 = vunpack.c.l.b16 %v646
      %v697 = vunpack.c.l.b16 %v647
      %v698 = vpack.c.b16 %v693, %v692
      %v699 = vpack.c.b16 %v695, %v694
      %v700 = vpack.c.b16 %v697, %v696
      %vm703 = vcmask 359424
      %v705 = vsel %vm703, %v669, 0
      %v708 = vsel %vm703, %v677, 0
      %v711 = vsel %vm703, %v685, 0
      %vm713 = vcmask 1045504
      %v715 = vsel %vm713, %v700, 0
      %717 = vmatprep.subr.bf16.mxu0 0
      %718 = vmatpush1.bf16.msra.mxu0 0
      %719 = vmatprep.subr.bf16.mxu0 0
      %720 = vmatpush1.bf16.msra.mxu0 0
      %721 = vmatprep.subr.bf16.mxu0 0
      %722 = vmatpush1.bf16.msra.mxu0 0
      %723 = vmatprep.subr.bf16.mxu0 0
      %724 = vmatpush1.bf16.msra.mxu0 0
      %725 = vmatprep.subr.bf16.mxu0 0
      %726 = vmatpush1.bf16.msra.mxu0 0
      %727 = vmatprep.subr.bf16.mxu0 0
      %728 = vmatpush1.bf16.msra.mxu0 %v715
      %729 = vmatprep.subr.bf16.mxu0 0
      %730 = vmatpush1.bf16.msra.mxu0 %v699
      %731 = vmatprep.subr.bf16.mxu0 0
      %732 = vmatpush1.bf16.msra.mxu0 %v698
      %733 = vmatprep.subr.bf16.mxu0 0
      %734 = vmatpush2.bf16.msra.mxu0 0
      %735 = vmatprep.subr.bf16.mxu0 0
      %736 = vmatpush2.bf16.msra.mxu0 0
      %737 = vmatprep.subr.bf16.mxu0 0
      %738 = vmatpush2.bf16.msra.mxu0 0
      %739 = vmatprep.subr.bf16.mxu0 0
      %740 = vmatpush2.bf16.msra.mxu0 0
      %741 = vmatprep.subr.bf16.mxu0 0
      %742 = vmatpush2.bf16.msra.mxu0 0
      %743 = vmatprep.subr.bf16.mxu0 0
      %744 = vmatpush2.bf16.msra.mxu0 0
      %745 = vmatprep.subr.bf16.mxu0 0
      %746 = vmatpush2.bf16.msra.mxu0 0
      %747 = vmatprep.subr.bf16.mxu0 0
      %748 = vmatpush2.bf16.msra.mxu0 0
      %749 = vmatprep.mubr.bf16.mxu0 0
      %750 = vmatmul.mubr.bf16.gmra.mxu0 %v705
      %v751 = vpop.f32.mrf.mxu0
      %v752 = vadd.f32 %v653, %v751
      %v753 = vpop.f32.mrf.mxu0
      %v754 = vpop.f32.mrf.mxu0
      %v755 = vadd.f32 %v653, %v754
      %v756 = vpop.f32.mrf.mxu0
      %757 = vmatprep.mubr.bf16.mxu0 0
      %758 = vmatmul.mubr.bf16.gmra.mxu0 %v708
      %v759 = vpop.f32.mrf.mxu0
      %v760 = vadd.f32 %v653, %v759
      %v761 = vpop.f32.mrf.mxu0
      %v762 = vpop.f32.mrf.mxu0
      %v763 = vadd.f32 %v653, %v762
      %v764 = vpop.f32.mrf.mxu0
      %765 = vmatprep.mubr.bf16.mxu0 0
      %766 = vmatmul.mubr.bf16.gmra.mxu0 %v711
      %v767 = vpop.f32.mrf.mxu0
      %v768 = vadd.f32 %v653, %v767
      %v769 = vpop.f32.mrf.mxu0
      %v770 = vpop.f32.mrf.mxu0
      %v771 = vadd.f32 %v653, %v770
      %v772 = vpop.f32.mrf.mxu0
      %773 = vdwg.mxu0
      %vm774 = vcmp.ge.f32.partialorder %v752, 0.0
      %vm775 = vcmp.ge.f32.partialorder %v755, 0.0
      %vm776 = vcmp.ge.f32.partialorder %v760, 0.0
      %vm777 = vcmp.ge.f32.partialorder %v763, 0.0
      %vm778 = vcmp.ge.f32.partialorder %v768, 0.0
      %vm779 = vcmp.ge.f32.partialorder %v771, 0.0
      %v780 = vmul.f32 %v752, 0.1
      %v781 = vmul.f32 %v755, 0.1
      %v782 = vmul.f32 %v760, 0.1
      %v783 = vmul.f32 %v763, 0.1
      %v784 = vmul.f32 %v768, 0.1
      %v785 = vmul.f32 %v771, 0.1
      %v786 = vsel %vm774, %v752, %v780
      %v787 = vsel %vm775, %v755, %v781
      %v788 = vsel %vm776, %v760, %v782
      %v789 = vsel %vm777, %v763, %v783
      %v790 = vsel %vm778, %v768, %v784
      %v791 = vsel %vm779, %v771, %v785
      %s792 = ssub.s32 %s318, 16
      %v793 = vlaneseq
      %v794 = vshrl.u32 %v793, 7
      %v795 = vadd.s32 %v794, 8
      %v796 = vadd.s32 %v794, 16
      %v797 = vadd.s32 %v794, 24
      %v798 = vadd.s32 %v794, 32
      %v799 = vadd.s32 %v794, 40
      %v800 = vstv %s792
      %v801 = vadd.s32 %v794, %v800
      %v802 = vadd.s32 %v795, %v800
      %v803 = vadd.s32 %v796, %v800
      %v804 = vadd.s32 %v797, %v800
      %v805 = vadd.s32 %v798, %v800
      %v806 = vadd.s32 %v799, %v800
      %vm807 = vcmp.ge.s32.totalorder %v801, 0
      %vm808 = vcmp.ge.s32.totalorder %v802, 0
      %vm809 = vcmp.ge.s32.totalorder %v803, 0
      %vm810 = vcmp.ge.s32.totalorder %v804, 0
      %vm811 = vcmp.ge.s32.totalorder %v805, 0
      %vm812 = vcmp.ge.s32.totalorder %v806, 0
      %vm813 = vcmp.lt.s32.totalorder %v801, 16
      %vm814 = vcmp.lt.s32.totalorder %v802, 16
      %vm815 = vcmp.lt.s32.totalorder %v803, 16
      %vm816 = vcmp.lt.s32.totalorder %v804, 16
      %vm817 = vcmp.lt.s32.totalorder %v805, 16
      %vm818 = vcmp.lt.s32.totalorder %v806, 16
      %vm819 = vmand %vm807, %vm813
      %vm820 = vmand %vm808, %vm814
      %vm821 = vmand %vm809, %vm815
      %vm822 = vmand %vm810, %vm816
      %vm823 = vmand %vm811, %vm817
      %vm824 = vmand %vm812, %vm818
      %v825 = vsel %vm819, 1, 0
      %v826 = vsel %vm820, 1, 0
      %v827 = vsel %vm821, 1, 0
      %v828 = vsel %vm822, 1, 0
      %v829 = vsel %vm823, 1, 0
      %v830 = vsel %vm824, 1, 0
      %vm831 = vcmp.eq.s32.totalorder %v825, 1
      %vm832 = vcmp.eq.s32.totalorder %v826, 1
      %vm833 = vcmp.eq.s32.totalorder %v827, 1
      %vm834 = vcmp.eq.s32.totalorder %v828, 1
      %vm835 = vcmp.eq.s32.totalorder %v829, 1
      %vm836 = vcmp.eq.s32.totalorder %v830, 1
      %v837 = vsel %vm831, %v786, 0.0
      %v838 = vsel %vm832, %v787, 0.0
      %v839 = vsel %vm833, %v788, 0.0
      %v840 = vsel %vm834, %v789, 0.0
      %v841 = vsel %vm835, %v790, 0.0
      %v842 = vsel %vm836, %v791, 0.0
      %v843 = vpack.c.bf16 %v838, %v837
      %v844 = vpack.c.bf16 %v840, %v839
      %v845 = vpack.c.bf16 %v842, %v841
      %v847 = vshrl.u32 %v843, 16
      %v849 = vshll.u32 %v843, 16
      %v851 = vrot.slane %v849, 1
      %v852 = vor.u32 %v847, %v851
      %v854 = vshll.u32 %v844, 16
      %v856 = vrot.slane %v854, 1
      %v857 = vsel %vm332, %v852, %v856
      %v858 = vshrl.u32 %v844, 16
      %v860 = vor.u32 %v858, %v856
      %v862 = vshll.u32 %v845, 16
      %v864 = vrot.slane %v862, 1
      %v865 = vsel %vm332, %v860, %v864
      %v866 = vshrl.u32 %v845, 16
      %v868 = vor.u32 %v866, %v864
      %869 = vrot.lane.b32.xlu0 %v857, 32
      %v870 = vpop.permute.xlu0 %869
      %871 = vrot.lane.b32.xlu0 %v865, 32
      %v872 = vpop.permute.xlu0 %871
      %873 = vrot.lane.b32.xlu0 %v868, 32
      %v874 = vpop.permute.xlu0 %873
      %v878 = vrot.slane %v843, 1
      %v879 = vrot.slane %v844, 1
      %v880 = vsel %vm376, %v878, %v879
      %v881 = vrot.slane %v845, 1
      %v882 = vsel %vm376, %v879, %v881
      %883 = vrot.lane.b32.xlu0 %v880, 64
      %v884 = vpop.permute.xlu0 %883
      %885 = vrot.lane.b32.xlu0 %v882, 64
      %v886 = vpop.permute.xlu0 %885
      %887 = vrot.lane.b32.xlu0 %v881, 64
      %v888 = vpop.permute.xlu0 %887
      %v889 = vrot.slane %v847, 1
      %v890 = vrot.slane %v849, 2
      %v891 = vor.u32 %v889, %v890
      %v892 = vrot.slane %v858, 1
      %v893 = vrot.slane %v854, 2
      %v894 = vor.u32 %v892, %v893
      %v895 = vsel %vm392, %v891, %v894
      %v896 = vrot.slane %v866, 1
      %v897 = vrot.slane %v862, 2
      %v898 = vor.u32 %v896, %v897
      %v899 = vsel %vm392, %v894, %v898
      %900 = vrot.lane.b32.xlu0 %v895, 96
      %v901 = vpop.permute.xlu0 %900
      %902 = vrot.lane.b32.xlu0 %v899, 96
      %v903 = vpop.permute.xlu0 %902
      %904 = vrot.lane.b32.xlu0 %v898, 96
      %v905 = vpop.permute.xlu0 %904
      %v906 = vrot.slane %v843, 2
      %v907 = vrot.slane %v844, 2
      %v908 = vsel %vm416, %v906, %v907
      %v909 = vrot.slane %v845, 2
      %v910 = vsel %vm416, %v907, %v909
      %v911 = vrot.slane %v847, 2
      %v912 = vrot.slane %v849, 3
      %v913 = vor.u32 %v911, %v912
      %v914 = vrot.slane %v858, 2
      %v915 = vrot.slane %v854, 3
      %v916 = vor.u32 %v914, %v915
      %v917 = vsel %vm432, %v913, %v916
      %v918 = vrot.slane %v866, 2
      %v919 = vrot.slane %v862, 3
      %v920 = vor.u32 %v918, %v919
      %v921 = vsel %vm432, %v916, %v920
      %922 = vrot.lane.b32.xlu0 %v917, 32
      %v923 = vpop.permute.xlu0 %922
      %924 = vrot.lane.b32.xlu0 %v921, 32
      %v925 = vpop.permute.xlu0 %924
      %926 = vrot.lane.b32.xlu0 %v920, 32
      %v927 = vpop.permute.xlu0 %926
      %v928 = vrot.slane %v843, 3
      %v929 = vrot.slane %v844, 3
      %v930 = vsel %vm456, %v928, %v929
      %v931 = vrot.slane %v845, 3
      %v932 = vsel %vm456, %v929, %v931
      %933 = vrot.lane.b32.xlu0 %v930, 64
      %v934 = vpop.permute.xlu0 %933
      %935 = vrot.lane.b32.xlu0 %v932, 64
      %v936 = vpop.permute.xlu0 %935
      %937 = vrot.lane.b32.xlu0 %v931, 64
      %v938 = vpop.permute.xlu0 %937
      %v939 = vrot.slane %v847, 3
      %v940 = vrot.slane %v849, 4
      %v941 = vor.u32 %v939, %v940
      %v942 = vrot.slane %v858, 3
      %v943 = vrot.slane %v854, 4
      %v944 = vor.u32 %v942, %v943
      %v945 = vsel %vm472, %v941, %v944
      %v946 = vrot.slane %v866, 3
      %v947 = vrot.slane %v862, 4
      %v948 = vor.u32 %v946, %v947
      %v949 = vsel %vm472, %v944, %v948
      %950 = vrot.lane.b32.xlu0 %v945, 96
      %v951 = vpop.permute.xlu0 %950
      %952 = vrot.lane.b32.xlu0 %v949, 96
      %v953 = vpop.permute.xlu0 %952
      %954 = vrot.lane.b32.xlu0 %v948, 96
      %v955 = vpop.permute.xlu0 %954
      %v957 = vsel %vm615, %v843, %v870
      %v959 = vsel %vm615, %v844, %v872
      %v961 = vsel %vm615, %v845, %v874
      %vm962 = vcmask 523264
      %v964 = vsel %vm962, %v957, %v884
      %v966 = vsel %vm962, %v959, %v886
      %v968 = vsel %vm962, %v961, %v888
      %vm969 = vcmask 785408
      %v971 = vsel %vm969, %v964, %v901
      %v973 = vsel %vm969, %v966, %v903
      %v975 = vsel %vm969, %v968, %v905
      %v978 = vsel %vm615, %v908, %v923
      %v981 = vsel %vm615, %v910, %v925
      %v984 = vsel %vm615, %v909, %v927
      %v986 = vsel %vm962, %v978, %v934
      %v988 = vsel %vm962, %v981, %v936
      %v990 = vsel %vm962, %v984, %v938
      %v992 = vsel %vm969, %v986, %v951
      %v994 = vsel %vm969, %v988, %v953
      %v996 = vsel %vm969, %v990, %v955
      %v997 = vld [vmem:[%s3] sm:$0xf]
      %v998 = vld [vmem:[%s3 + $0x4] sm:$0xf]
      %v999 = vld [vmem:[%s3 + $0x8] sm:$0xf]
      %v1000 = vld [vmem:[%s3 + $0xc] sm:$0xf]
      %v1001 = vld [vmem:[%s3 + $0x10] sm:$0xf]
      %v1002 = vld [vmem:[%s3 + $0x14] sm:$0xf]
      %v1003 = vld [vmem:[%s3 + $0x18] sm:$0xf]
      %v1004 = vld [vmem:[%s3 + $0x1c] sm:$0xf]
      %v1005 = vld [vmem:[%s3 + $0x20] sm:$0xf]
      %v1006 = vld [vmem:[%s3 + $0x24] sm:$0xf]
      %v1007 = vld [vmem:[%s3 + $0x28] sm:$0xf]
      %v1008 = vld [vmem:[%s3 + $0x2c] sm:$0xf]
      %v1009 = vld [vmem:[%s3 + $0x30] sm:$0xf]
      %v1010 = vld [vmem:[%s3 + $0x34] sm:$0xf]
      %v1011 = vld [vmem:[%s3 + $0x38] sm:$0xf]
      %v1012 = vld [vmem:[%s3 + $0x3c] sm:$0xf]
      %v1013 = vld [vmem:[%s3 + $0x40] sm:$0xf]
      %v1014 = vld [vmem:[%s3 + $0x44] sm:$0xf]
      %v1015 = vld [vmem:[%s3 + $0x48] sm:$0xf]
      %v1016 = vld [vmem:[%s3 + $0x4c] sm:$0xf]
      %v1017 = vld [vmem:[%s3 + $0x50] sm:$0xf]
      %v1018 = vld [vmem:[%s3 + $0x54] sm:$0xf]
      %v1019 = vld [vmem:[%s3 + $0x58] sm:$0xf]
      %v1020 = vld [vmem:[%s3 + $0x5c] sm:$0xf]
      %v1021 = vld [vmem:[%s3 + $0x60] sm:$0xf]
      %v1022 = vld [vmem:[%s3 + $0x64] sm:$0xf]
      %v1023 = vld [vmem:[%s3 + $0x68] sm:$0xf]
      %v1024 = vld [vmem:[%s3 + $0x6c] sm:$0xf]
      %v1025 = vld [vmem:[%s3 + $0x70] sm:$0xf]
      %v1026 = vld [vmem:[%s3 + $0x74] sm:$0xf]
      %v1027 = vld [vmem:[%s3 + $0x78] sm:$0xf]
      %v1028 = vld [vmem:[%s3 + $0x7c] sm:$0xf]
      %v1029 = vld [vmem:[%s3 + $0x80] sm:$0xf]
      %v1030 = vld [vmem:[%s3 + $0x84] sm:$0xf]
      %v1031 = vld [vmem:[%s3 + $0x88] sm:$0xf]
      %v1032 = vld [vmem:[%s3 + $0x8c] sm:$0xf]
      %v1033 = vld [vmem:[%s3 + $0x90] sm:$0xf]
      %v1034 = vld [vmem:[%s3 + $0x94] sm:$0xf]
      %v1035 = vld [vmem:[%s3 + $0x98] sm:$0xf]
      %v1036 = vld [vmem:[%s3 + $0x9c] sm:$0xf]
      %v1037 = vld [vmem:[%s3 + $0xa0] sm:$0xf]
      %v1038 = vld [vmem:[%s3 + $0xa4] sm:$0xf]
      %v1039 = vld [vmem:[%s3 + $0xa8] sm:$0xf]
      %v1040 = vld [vmem:[%s3 + $0xac] sm:$0xf]
      %vm1041 = vsmask.f32 2304
      %v1042 = vshrl.u32 %v964, 16
      %v1044 = vrot.slane %v1042, 5
      %v1045 = vshll.u32 %v964, 16
      %v1047 = vrot.slane %v1045, 6
      %v1048 = vor.u32 %v1044, %v1047
      %v1049 = vshrl.u32 %v966, 16
      %v1051 = vrot.slane %v1049, 5
      %v1052 = vshll.u32 %v966, 16
      %v1054 = vrot.slane %v1052, 6
      %v1055 = vor.u32 %v1051, %v1054
      %v1056 = vsel %vm1041, %v1048, %v1055
      %v1057 = vshrl.u32 %v968, 16
      %v1059 = vrot.slane %v1057, 5
      %v1060 = vshll.u32 %v968, 16
      %v1062 = vrot.slane %v1060, 6
      %v1063 = vor.u32 %v1059, %v1062
      %v1064 = vsel %vm1041, %v1055, %v1063
      %v1077 = vunpack.c.l.b16 %v1029
      %v1078 = vunpack.c.l.b16 %v1030
      %v1079 = vunpack.c.l.b16 %v1031
      %v1080 = vunpack.c.l.b16 %v1032
      %v1081 = vunpack.c.l.b16 %v1033
      %v1082 = vunpack.c.l.b16 %v1034
      %v1083 = vunpack.c.l.b16 %v1035
      %v1084 = vunpack.c.l.b16 %v1036
      %v1085 = vunpack.c.l.b16 %v1037
      %v1086 = vunpack.c.l.b16 %v1038
      %v1087 = vunpack.c.l.b16 %v1039
      %v1088 = vunpack.c.l.b16 %v1040
      %v1089 = vpack.c.b16 %v1078, %v1077
      %v1090 = vpack.c.b16 %v1080, %v1079
      %v1091 = vpack.c.b16 %v1082, %v1081
      %v1092 = vpack.c.b16 %v1084, %v1083
      %v1093 = vpack.c.b16 %v1086, %v1085
      %v1094 = vpack.c.b16 %v1088, %v1087
      %v1102 = vsel %vm969, %v1056, 0
      %v1105 = vsel %vm969, %v1064, 0
      %1107 = vmatprep.subr.bf16.mxu0 0
      %1108 = vmatpush1.bf16.msra.mxu0 0
      %1109 = vmatprep.subr.bf16.mxu0 0
      %1110 = vmatpush1.bf16.msra.mxu0 0
      %1111 = vmatprep.subr.bf16.mxu0 0
      %1112 = vmatpush1.bf16.msra.mxu0 %v1094
      %1113 = vmatprep.subr.bf16.mxu0 0
      %1114 = vmatpush1.bf16.msra.mxu0 %v1093
      %1115 = vmatprep.subr.bf16.mxu0 0
      %1116 = vmatpush1.bf16.msra.mxu0 %v1092
      %1117 = vmatprep.subr.bf16.mxu0 0
      %1118 = vmatpush1.bf16.msra.mxu0 %v1091
      %1119 = vmatprep.subr.bf16.mxu0 0
      %1120 = vmatpush1.bf16.msra.mxu0 %v1090
      %1121 = vmatprep.subr.bf16.mxu0 0
      %1122 = vmatpush1.bf16.msra.mxu0 %v1089
      %1123 = vmatprep.subr.bf16.mxu0 0
      %1124 = vmatpush2.bf16.msra.mxu0 0
      %1125 = vmatprep.subr.bf16.mxu0 0
      %1126 = vmatpush2.bf16.msra.mxu0 0
      %1127 = vmatprep.subr.bf16.mxu0 0
      %1128 = vmatpush2.bf16.msra.mxu0 0
      %1129 = vmatprep.subr.bf16.mxu0 0
      %1130 = vmatpush2.bf16.msra.mxu0 0
      %1131 = vmatprep.subr.bf16.mxu0 0
      %1132 = vmatpush2.bf16.msra.mxu0 0
      %1133 = vmatprep.subr.bf16.mxu0 0
      %1134 = vmatpush2.bf16.msra.mxu0 0
      %1135 = vmatprep.subr.bf16.mxu0 0
      %1136 = vmatpush2.bf16.msra.mxu0 0
      %1137 = vmatprep.subr.bf16.mxu0 0
      %1138 = vmatpush2.bf16.msra.mxu0 0
      %1139 = vmatprep.mubr.bf16.mxu0 0
      %1140 = vmatmul.mubr.bf16.gmra.mxu0 %v1102
      %v1141 = vpop.f32.mrf.mxu0
      %v1142 = vadd.f32 0.0, %v1141
      %v1143 = vpop.f32.mrf.mxu0
      %v1144 = vpop.f32.mrf.mxu0
      %v1145 = vadd.f32 0.0, %v1144
      %v1146 = vpop.f32.mrf.mxu0
      %1147 = vmatprep.mubr.bf16.mxu0 0
      %1148 = vmatmul.mubr.bf16.gmra.mxu0 %v1105
      %v1149 = vpop.f32.mrf.mxu0
      %v1150 = vadd.f32 0.0, %v1149
      %v1151 = vpop.f32.mrf.mxu0
      %v1152 = vpop.f32.mrf.mxu0
      %v1153 = vadd.f32 0.0, %v1152
      %v1154 = vpop.f32.mrf.mxu0
      %1155 = vdwg.mxu0
      %v1156 = vshrl.u32 %v971, 16
      %v1158 = vrot.slane %v1156, 1
      %v1159 = vshll.u32 %v971, 16
      %v1161 = vrot.slane %v1159, 2
      %v1162 = vor.u32 %v1158, %v1161
      %v1163 = vshrl.u32 %v973, 16
      %v1165 = vrot.slane %v1163, 1
      %v1166 = vshll.u32 %v973, 16
      %v1168 = vrot.slane %v1166, 2
      %v1169 = vor.u32 %v1165, %v1168
      %v1170 = vsel %vm392, %v1162, %v1169
      %v1171 = vshrl.u32 %v992, 16
      %v1173 = vrot.slane %v1171, 1
      %v1174 = vshll.u32 %v992, 16
      %v1176 = vrot.slane %v1174, 2
      %v1177 = vor.u32 %v1173, %v1176
      %v1178 = vshrl.u32 %v994, 16
      %v1180 = vrot.slane %v1178, 1
      %v1181 = vshll.u32 %v994, 16
      %v1183 = vrot.slane %v1181, 2
      %v1184 = vor.u32 %v1180, %v1183
      %v1185 = vsel %vm392, %v1177, %v1184
      %v1186 = vshrl.u32 %v975, 16
      %v1188 = vrot.slane %v1186, 1
      %v1189 = vshll.u32 %v975, 16
      %v1191 = vrot.slane %v1189, 2
      %v1192 = vor.u32 %v1188, %v1191
      %v1193 = vsel %vm392, %v1169, %v1192
      %v1194 = vshrl.u32 %v996, 16
      %v1196 = vrot.slane %v1194, 1
      %v1197 = vshll.u32 %v996, 16
      %v1199 = vrot.slane %v1197, 2
      %v1200 = vor.u32 %v1196, %v1199
      %v1201 = vsel %vm392, %v1184, %v1200
      %v1238 = vunpack.c.l.b16 %v997
      %v1239 = vunpack.c.l.b16 %v998
      %v1240 = vunpack.c.l.b16 %v999
      %v1241 = vunpack.c.l.b16 %v1000
      %v1242 = vunpack.c.l.b16 %v1001
      %v1243 = vunpack.c.l.b16 %v1002
      %v1244 = vunpack.c.l.b16 %v1003
      %v1245 = vunpack.c.l.b16 %v1004
      %v1246 = vunpack.c.l.b16 %v1005
      %v1247 = vunpack.c.l.b16 %v1006
      %v1248 = vunpack.c.l.b16 %v1007
      %v1249 = vunpack.c.l.b16 %v1008
      %v1250 = vunpack.c.l.b16 %v1009
      %v1251 = vunpack.c.l.b16 %v1010
      %v1252 = vunpack.c.l.b16 %v1011
      %v1253 = vunpack.c.l.b16 %v1012
      %v1254 = vunpack.c.l.b16 %v1013
      %v1255 = vunpack.c.l.b16 %v1014
      %v1256 = vunpack.c.l.b16 %v1015
      %v1257 = vunpack.c.l.b16 %v1016
      %v1258 = vunpack.c.l.b16 %v1017
      %v1259 = vunpack.c.l.b16 %v1018
      %v1260 = vunpack.c.l.b16 %v1019
      %v1261 = vunpack.c.l.b16 %v1020
      %v1262 = vunpack.c.l.b16 %v1021
      %v1263 = vunpack.c.l.b16 %v1022
      %v1264 = vunpack.c.l.b16 %v1023
      %v1265 = vunpack.c.l.b16 %v1024
      %v1266 = vunpack.c.l.b16 %v1025
      %v1267 = vunpack.c.l.b16 %v1026
      %v1268 = vunpack.c.l.b16 %v1027
      %v1269 = vunpack.c.l.b16 %v1028
      %v1270 = vpack.c.b16 %v1239, %v1238
      %v1271 = vpack.c.b16 %v1241, %v1240
      %v1272 = vpack.c.b16 %v1243, %v1242
      %v1273 = vpack.c.b16 %v1245, %v1244
      %v1274 = vpack.c.b16 %v1247, %v1246
      %v1275 = vpack.c.b16 %v1249, %v1248
      %v1276 = vpack.c.b16 %v1251, %v1250
      %v1277 = vpack.c.b16 %v1253, %v1252
      %v1278 = vpack.c.b16 %v1255, %v1254
      %v1279 = vpack.c.b16 %v1257, %v1256
      %v1280 = vpack.c.b16 %v1259, %v1258
      %v1281 = vpack.c.b16 %v1261, %v1260
      %v1282 = vpack.c.b16 %v1263, %v1262
      %v1283 = vpack.c.b16 %v1265, %v1264
      %v1284 = vpack.c.b16 %v1267, %v1266
      %v1285 = vpack.c.b16 %v1269, %v1268
      %1302 = vmatprep.subr.bf16.mxu0 0
      %1303 = vmatpush1.bf16.msra.mxu0 %v1277
      %1304 = vmatprep.subr.bf16.mxu0 0
      %1305 = vmatpush1.bf16.msra.mxu0 %v1276
      %1306 = vmatprep.subr.bf16.mxu0 0
      %1307 = vmatpush1.bf16.msra.mxu0 %v1275
      %1308 = vmatprep.subr.bf16.mxu0 0
      %1309 = vmatpush1.bf16.msra.mxu0 %v1274
      %1310 = vmatprep.subr.bf16.mxu0 0
      %1311 = vmatpush1.bf16.msra.mxu0 %v1273
      %1312 = vmatprep.subr.bf16.mxu0 0
      %1313 = vmatpush1.bf16.msra.mxu0 %v1272
      %1314 = vmatprep.subr.bf16.mxu0 0
      %1315 = vmatpush1.bf16.msra.mxu0 %v1271
      %1316 = vmatprep.subr.bf16.mxu0 0
      %1317 = vmatpush1.bf16.msra.mxu0 %v1270
      %1318 = vmatprep.subr.bf16.mxu0 0
      %1319 = vmatpush2.bf16.msra.mxu0 %v1285
      %1320 = vmatprep.subr.bf16.mxu0 0
      %1321 = vmatpush2.bf16.msra.mxu0 %v1284
      %1322 = vmatprep.subr.bf16.mxu0 0
      %1323 = vmatpush2.bf16.msra.mxu0 %v1283
      %1324 = vmatprep.subr.bf16.mxu0 0
      %1325 = vmatpush2.bf16.msra.mxu0 %v1282
      %1326 = vmatprep.subr.bf16.mxu0 0
      %1327 = vmatpush2.bf16.msra.mxu0 %v1281
      %1328 = vmatprep.subr.bf16.mxu0 0
      %1329 = vmatpush2.bf16.msra.mxu0 %v1280
      %1330 = vmatprep.subr.bf16.mxu0 0
      %1331 = vmatpush2.bf16.msra.mxu0 %v1279
      %1332 = vmatprep.subr.bf16.mxu0 0
      %1333 = vmatpush2.bf16.msra.mxu0 %v1278
      %1334 = vmatprep.mubr.bf16.mxu0 %v1185
      %1335 = vmatmul.mubr.bf16.gmra.mxu0 %v1170
      %v1336 = vpop.f32.mrf.mxu0
      %v1337 = vadd.f32 %v1142, %v1336
      %v1338 = vpop.f32.mrf.mxu0
      %v1339 = vpop.f32.mrf.mxu0
      %v1340 = vadd.f32 %v1145, %v1339
      %v1341 = vpop.f32.mrf.mxu0
      %1342 = vmatprep.mubr.bf16.mxu0 %v1201
      %1343 = vmatmul.mubr.bf16.gmra.mxu0 %v1193
      %v1344 = vpop.f32.mrf.mxu0
      %v1345 = vadd.f32 %v1150, %v1344
      %v1346 = vpop.f32.mrf.mxu0
      %v1347 = vpop.f32.mrf.mxu0
      %v1348 = vadd.f32 %v1153, %v1347
      %v1349 = vpop.f32.mrf.mxu0
      %1350 = vdwg.mxu0
      %v1351 = vld [vmem:[%s4] sm:$0x1]
      %v1353 = vlaneseq
      %v1354 = vshrl.u32 %v1353, 7
      %v1355 = vsub.s32 0, %v1354
      %v1356 = vrot.slane %v1351, %v1355
      %v1358 = vadd.f32 %v1337, %v1356
      %v1359 = vadd.f32 %v1340, %v1356
      %v1360 = vadd.f32 %v1345, %v1356
      %v1361 = vadd.f32 %v1348, %v1356
      %vm1362 = vcmp.ge.f32.partialorder %v1358, 0.0
      %vm1363 = vcmp.ge.f32.partialorder %v1359, 0.0
      %vm1364 = vcmp.ge.f32.partialorder %v1360, 0.0
      %vm1365 = vcmp.ge.f32.partialorder %v1361, 0.0
      %v1366 = vmul.f32 %v1358, 0.1
      %v1367 = vmul.f32 %v1359, 0.1
      %v1368 = vmul.f32 %v1360, 0.1
      %v1369 = vmul.f32 %v1361, 0.1
      %v1370 = vsel %vm1362, %v1358, %v1366
      %v1371 = vsel %vm1363, %v1359, %v1367
      %v1372 = vsel %vm1364, %v1360, %v1368
      %v1373 = vsel %vm1365, %v1361, %v1369
      %s1374 = ssub.s32 %s318, 8
      %v1375 = vstv %s1374
      %v1376 = vadd.s32 %v794, %v1375
      %v1377 = vadd.s32 %v795, %v1375
      %v1378 = vadd.s32 %v796, %v1375
      %v1379 = vadd.s32 %v797, %v1375
      %vm1380 = vcmp.ge.s32.totalorder %v1376, 0
      %vm1381 = vcmp.ge.s32.totalorder %v1377, 0
      %vm1382 = vcmp.ge.s32.totalorder %v1378, 0
      %vm1383 = vcmp.ge.s32.totalorder %v1379, 0
      %vm1384 = vcmp.lt.s32.totalorder %v1376, 16
      %vm1385 = vcmp.lt.s32.totalorder %v1377, 16
      %vm1386 = vcmp.lt.s32.totalorder %v1378, 16
      %vm1387 = vcmp.lt.s32.totalorder %v1379, 16
      %vm1388 = vmand %vm1380, %vm1384
      %vm1389 = vmand %vm1381, %vm1385
      %vm1390 = vmand %vm1382, %vm1386
      %vm1391 = vmand %vm1383, %vm1387
      %v1392 = vsel %vm1388, 1, 0
      %v1393 = vsel %vm1389, 1, 0
      %v1394 = vsel %vm1390, 1, 0
      %v1395 = vsel %vm1391, 1, 0
      %vm1396 = vcmp.eq.s32.totalorder %v1392, 1
      %vm1397 = vcmp.eq.s32.totalorder %v1393, 1
      %vm1398 = vcmp.eq.s32.totalorder %v1394, 1
      %vm1399 = vcmp.eq.s32.totalorder %v1395, 1
      %v1400 = vsel %vm1396, %v1370, 0.0
      %v1401 = vsel %vm1397, %v1371, 0.0
      %v1402 = vsel %vm1398, %v1372, 0.0
      %v1403 = vsel %vm1399, %v1373, 0.0
      %v1404 = vpack.c.bf16 %v1401, %v1400
      %v1405 = vpack.c.bf16 %v1403, %v1402
      %v1406 = vld [vmem:[%s5] sm:$0xf]
      %v1407 = vld [vmem:[%s5 + $0x4] sm:$0xf]
      %v1408 = vld [vmem:[%s5 + $0x8] sm:$0xf]
      %v1409 = vld [vmem:[%s5 + $0xc] sm:$0xf]
      %v1414 = vunpack.c.l.b16 %v1406
      %v1415 = vunpack.c.l.b16 %v1407
      %v1416 = vunpack.c.l.b16 %v1408
      %v1417 = vunpack.c.l.b16 %v1409
      %v1418 = vpack.c.b16 %v1415, %v1414
      %v1419 = vpack.c.b16 %v1417, %v1416
      %v1423 = vsel %vm615, %v1404, 0
      %v1426 = vsel %vm615, %v1405, 0
      %1428 = vmatprep.subr.bf16.mxu0 0
      %1429 = vmatpush1.bf16.msra.mxu0 0
      %1430 = vmatprep.subr.bf16.mxu0 0
      %1431 = vmatpush1.bf16.msra.mxu0 0
      %1432 = vmatprep.subr.bf16.mxu0 0
      %1433 = vmatpush1.bf16.msra.mxu0 0
      %1434 = vmatprep.subr.bf16.mxu0 0
      %1435 = vmatpush1.bf16.msra.mxu0 0
      %1436 = vmatprep.subr.bf16.mxu0 0
      %1437 = vmatpush1.bf16.msra.mxu0 0
      %1438 = vmatprep.subr.bf16.mxu0 0
      %1439 = vmatpush1.bf16.msra.mxu0 0
      %1440 = vmatprep.subr.bf16.mxu0 0
      %1441 = vmatpush1.bf16.msra.mxu0 %v1419
      %1442 = vmatprep.subr.bf16.mxu0 0
      %1443 = vmatpush1.bf16.msra.mxu0 %v1418
      %1444 = vmatprep.subr.bf16.mxu0 0
      %1445 = vmatpush2.bf16.msra.mxu0 0
      %1446 = vmatprep.subr.bf16.mxu0 0
      %1447 = vmatpush2.bf16.msra.mxu0 0
      %1448 = vmatprep.subr.bf16.mxu0 0
      %1449 = vmatpush2.bf16.msra.mxu0 0
      %1450 = vmatprep.subr.bf16.mxu0 0
      %1451 = vmatpush2.bf16.msra.mxu0 0
      %1452 = vmatprep.subr.bf16.mxu0 0
      %1453 = vmatpush2.bf16.msra.mxu0 0
      %1454 = vmatprep.subr.bf16.mxu0 0
      %1455 = vmatpush2.bf16.msra.mxu0 0
      %1456 = vmatprep.subr.bf16.mxu0 0
      %1457 = vmatpush2.bf16.msra.mxu0 0
      %1458 = vmatprep.subr.bf16.mxu0 0
      %1459 = vmatpush2.bf16.msra.mxu0 0
      %1460 = vmatprep.mubr.bf16.mxu0 0
      %1461 = vmatmul.mubr.bf16.gmra.mxu0 %v1423
      %v1462 = vpop.f32.mrf.mxu0
      %v1463 = vadd.f32 0.0, %v1462
      %v1464 = vpop.f32.mrf.mxu0
      %v1465 = vpop.f32.mrf.mxu0
      %v1466 = vadd.f32 0.0, %v1465
      %v1467 = vpop.f32.mrf.mxu0
      %1468 = vmatprep.mubr.bf16.mxu0 0
      %1469 = vmatmul.mubr.bf16.gmra.mxu0 %v1426
      %v1470 = vpop.f32.mrf.mxu0
      %v1471 = vadd.f32 0.0, %v1470
      %v1472 = vpop.f32.mrf.mxu0
      %v1473 = vpop.f32.mrf.mxu0
      %v1474 = vadd.f32 0.0, %v1473
      %v1475 = vpop.f32.mrf.mxu0
      %1476 = vdwg.mxu0
      %vm1480 = vcmask 1046528
      %v1481 = vrot.slane %v1463, 1
      %v1482 = vrot.slane %v1466, 1
      %v1483 = vsel %vm1480, %v1481, %v1482
      %v1484 = vrot.slane %v1471, 1
      %v1485 = vsel %vm1480, %v1482, %v1484
      %1486 = vrot.lane.b32.xlu0 %v1483, 120
      %v1487 = vpop.permute.xlu0 %1486
      %1488 = vrot.lane.b32.xlu0 %v1485, 120
      %v1489 = vpop.permute.xlu0 %1488
      %1490 = vrot.lane.b32.xlu0 %v1484, 120
      %v1491 = vpop.permute.xlu0 %1490
      %v1495 = vadd.f32 %v1463, %v1487
      %v1496 = vadd.f32 %v1466, %v1489
      %v1497 = vadd.f32 %v1471, %v1491
      %v1498 = vrot.slane %v1463, 2
      %v1499 = vrot.slane %v1466, 2
      %v1500 = vsel %vm713, %v1498, %v1499
      %v1501 = vrot.slane %v1471, 2
      %v1502 = vsel %vm713, %v1499, %v1501
      %1503 = vrot.lane.b32.xlu0 %v1500, 112
      %v1504 = vpop.permute.xlu0 %1503
      %1505 = vrot.lane.b32.xlu0 %v1502, 112
      %v1506 = vpop.permute.xlu0 %1505
      %1507 = vrot.lane.b32.xlu0 %v1501, 112
      %v1508 = vpop.permute.xlu0 %1507
      %v1512 = vadd.f32 %v1495, %v1504
      %v1513 = vadd.f32 %v1496, %v1506
      %v1514 = vadd.f32 %v1497, %v1508
      %vm1515 = vcmask 1044480
      %v1516 = vrot.slane %v1463, 3
      %v1517 = vrot.slane %v1466, 3
      %v1518 = vsel %vm1515, %v1516, %v1517
      %v1519 = vrot.slane %v1471, 3
      %v1520 = vsel %vm1515, %v1517, %v1519
      %1521 = vrot.lane.b32.xlu0 %v1518, 104
      %v1522 = vpop.permute.xlu0 %1521
      %1523 = vrot.lane.b32.xlu0 %v1520, 104
      %v1524 = vpop.permute.xlu0 %1523
      %1525 = vrot.lane.b32.xlu0 %v1519, 104
      %v1526 = vpop.permute.xlu0 %1525
      %v1530 = vadd.f32 %v1512, %v1522
      %v1531 = vadd.f32 %v1513, %v1524
      %v1532 = vadd.f32 %v1514, %v1526
      %vm1533 = vcmask 1043456
      %v1534 = vrot.slane %v1463, 4
      %v1535 = vrot.slane %v1466, 4
      %v1536 = vsel %vm1533, %v1534, %v1535
      %v1537 = vrot.slane %v1471, 4
      %v1538 = vsel %vm1533, %v1535, %v1537
      %1539 = vrot.lane.b32.xlu0 %v1536, 96
      %v1540 = vpop.permute.xlu0 %1539
      %1541 = vrot.lane.b32.xlu0 %v1538, 96
      %v1542 = vpop.permute.xlu0 %1541
      %1543 = vrot.lane.b32.xlu0 %v1537, 96
      %v1544 = vpop.permute.xlu0 %1543
      %v1548 = vadd.f32 %v1530, %v1540
      %v1549 = vadd.f32 %v1531, %v1542
      %v1550 = vadd.f32 %v1532, %v1544
      %vm1551 = vcmask 1042432
      %v1552 = vrot.slane %v1466, 5
      %v1553 = vrot.slane %v1471, 5
      %v1554 = vsel %vm1551, %v1552, %v1553
      %1555 = vrot.lane.b32.xlu0 %v1552, 88
      %v1556 = vpop.permute.xlu0 %1555
      %1557 = vrot.lane.b32.xlu0 %v1554, 88
      %v1558 = vpop.permute.xlu0 %1557
      %1559 = vrot.lane.b32.xlu0 %v1553, 88
      %v1560 = vpop.permute.xlu0 %1559
      %v1564 = vadd.f32 %v1548, %v1556
      %v1565 = vadd.f32 %v1549, %v1558
      %v1566 = vadd.f32 %v1550, %v1560
      %vm1568 = vcmask 1041408
      %v1569 = vrot.slane %v1466, 6
      %v1570 = vrot.slane %v1471, 6
      %v1571 = vsel %vm1568, %v1569, %v1570
      %v1572 = vrot.slane %v1474, 6
      %v1573 = vsel %vm1568, %v1570, %v1572
      %1574 = vrot.lane.b32.xlu0 %v1569, 80
      %v1575 = vpop.permute.xlu0 %1574
      %1576 = vrot.lane.b32.xlu0 %v1571, 80
      %v1577 = vpop.permute.xlu0 %1576
      %1578 = vrot.lane.b32.xlu0 %v1573, 80
      %v1579 = vpop.permute.xlu0 %1578
      %v1583 = vadd.f32 %v1564, %v1575
      %v1584 = vadd.f32 %v1565, %v1577
      %v1585 = vadd.f32 %v1566, %v1579
      %vm1586 = vcmask 1040384
      %v1587 = vrot.slane %v1466, 7
      %v1588 = vrot.slane %v1471, 7
      %v1589 = vsel %vm1586, %v1587, %v1588
      %v1590 = vrot.slane %v1474, 7
      %v1591 = vsel %vm1586, %v1588, %v1590
      %1592 = vrot.lane.b32.xlu0 %v1587, 72
      %v1593 = vpop.permute.xlu0 %1592
      %1594 = vrot.lane.b32.xlu0 %v1589, 72
      %v1595 = vpop.permute.xlu0 %1594
      %1596 = vrot.lane.b32.xlu0 %v1591, 72
      %v1597 = vpop.permute.xlu0 %1596
      %v1601 = vadd.f32 %v1583, %v1593
      %v1602 = vadd.f32 %v1584, %v1595
      %v1603 = vadd.f32 %v1585, %v1597
      %1604 = vrot.lane.b32.xlu0 %v1466, 64
      %v1605 = vpop.permute.xlu0 %1604
      %1606 = vrot.lane.b32.xlu0 %v1471, 64
      %v1607 = vpop.permute.xlu0 %1606
      %1608 = vrot.lane.b32.xlu0 %v1474, 64
      %v1609 = vpop.permute.xlu0 %1608
      %v1613 = vadd.f32 %v1601, %v1605
      %v1614 = vadd.f32 %v1602, %v1607
      %v1615 = vadd.f32 %v1603, %v1609
      %v1616 = vrot.slane %v1474, 1
      %v1617 = vsel %vm1480, %v1484, %v1616
      %1618 = vrot.lane.b32.xlu0 %v1485, 56
      %v1619 = vpop.permute.xlu0 %1618
      %1620 = vrot.lane.b32.xlu0 %v1617, 56
      %v1621 = vpop.permute.xlu0 %1620
      %1622 = vrot.lane.b32.xlu0 %v1616, 56
      %v1623 = vpop.permute.xlu0 %1622
      %v1627 = vadd.f32 %v1613, %v1619
      %v1628 = vadd.f32 %v1614, %v1621
      %v1629 = vadd.f32 %v1615, %v1623
      %v1630 = vrot.slane %v1474, 2
      %v1631 = vsel %vm713, %v1501, %v1630
      %1632 = vrot.lane.b32.xlu0 %v1502, 48
      %v1633 = vpop.permute.xlu0 %1632
      %1634 = vrot.lane.b32.xlu0 %v1631, 48
      %v1635 = vpop.permute.xlu0 %1634
      %1636 = vrot.lane.b32.xlu0 %v1630, 48
      %v1637 = vpop.permute.xlu0 %1636
      %v1641 = vadd.f32 %v1627, %v1633
      %v1642 = vadd.f32 %v1628, %v1635
      %v1643 = vadd.f32 %v1629, %v1637
      %v1644 = vld [vmem:[%s6] sm:$0x1]
      %v1646 = vlaneseq
      %v1647 = vshrl.u32 %v1646, 7
      %v1648 = vsub.s32 0, %v1647
      %v1649 = vrot.slane %v1644, %v1648
      %v1651 = vadd.f32 %v1641, %v1649
      %v1652 = vadd.f32 %v1642, %v1649
      %v1653 = vadd.f32 %v1643, %v1649
      %vm1654 = vcmp.ge.f32.partialorder %v1651, 0.0
      %vm1655 = vcmp.ge.f32.partialorder %v1652, 0.0
      %vm1656 = vcmp.ge.f32.partialorder %v1653, 0.0
      %v1657 = vmul.f32 %v1651, 0.1
      %v1658 = vmul.f32 %v1652, 0.1
      %v1659 = vmul.f32 %v1653, 0.1
      %v1660 = vsel %vm1654, %v1651, %v1657
      %v1661 = vsel %vm1655, %v1652, %v1658
      %v1662 = vsel %vm1656, %v1653, %v1659
      %vm1663 = vcmask 64515
      %1664 = vst.msk [vmem:[%s300 - $0x3] sm:$0xf8] %vm1663, %v1660
      %1665 = vst.msk [vmem:[%s300 + $0x5] sm:$0xff] %vm561, %v1661
      %vm1666 = vcmask 59392
      %1667 = vst.msk [vmem:[%s300 + $0xd] sm:$0x7] %vm1666, %v1662
      %s1668 = smul.u32 2, %s23
      %p1669 = scmp.lt.s32.totalorder %s22, 1
      %s1670 = scalar_select %p1669, %s22, 1
      %p1671 = scmp.lt.s32.totalorder %s1668, 1
      %s1672 = scalar_select %p1671, %s1668, 1
      %s1673 = smul.addr %s1670, 2
      %s1674 = sadd.s32 %s1672, %s1673
      %s1675 = smul.addr %s1674, 8
      %s1676 = scalar_lea.vmem %s7, %s1675
      // Predicated region
      $region53: #{fully_conv_forward.1} parent=47 // pred_check
        %p1677 = pneg %p202
      $region54: #{fully_conv_forward.1} parent=47 // pred_check_branch
        %1679 = sbr.rel (%p1677) target = $region56
      $region55: #{fully_conv_forward.1} parent=47 // pred_region
        %s1680 = smul.u32 2, %s23
      $region56: #{fully_conv_forward.1} parent=47 // pred_fallthru
        _
    $region48: #{fully_conv_forward.1} parent=5 // pred_fallthru
      _
    %p1681 = scmp.le.s32.totalorder 2, %s13
    // Predicated region
    $region57: #{fully_conv_forward.1} parent=5 // pred_check
      %p1682 = pneg %p1681
    $region58: #{fully_conv_forward.1} parent=5 // pred_check_branch
      %1684 = sbr.rel (%p1682) target = $region60
    $region59: #{fully_conv_forward.1} parent=5 // pred_region
      %s1685 = ssub.s32 %s13, 2
      // Predicated region
      $region61: #{fully_conv_forward.1} parent=59 // pred_check
        %p1686 = pneg %p208
      $region62: #{fully_conv_forward.1} parent=59 // pred_check_branch
        %1688 = sbr.rel (%p1686) target = $region64
      $region63: #{fully_conv_forward.1} parent=59 // pred_region
        %s1689 = smul.u32 2, %s25
        %p1690 = scmp.lt.s32.totalorder %s24, 1
        %s1691 = scalar_select %p1690, %s24, 1
        %p1692 = scmp.lt.s32.totalorder %s1689, 1
        %s1693 = scalar_select %p1692, %s1689, 1
        %s1694 = smul.addr %s1691, 2
        %s1695 = sadd.s32 %s1693, %s1694
        %s1696 = smul.addr %s1695, 8
        %s1697 = scalar_lea.vmem %s7, %s1696
      $region64: #{fully_conv_forward.1} parent=59 // pred_fallthru
        _
    $region60: #{fully_conv_forward.1} parent=5 // pred_fallthru
      _
  $region6: #{fully_conv_forward.1} parent=0 // loop_footer
    %s17 = sadd.s32 1, %s13
  $region7: #{fully_conv_forward.1} parent=0 // loop_footer_branch
    %12 = sbr.rel target = $region3
  $region8: #{fully_conv_forward.1} parent=0 // loop_exit
    _

</llo_original>
